<compile_context>
chip_gen: v5e
topology: v5e:2x2
jax: 0.10.0
libtpu: 0.0.40
codegen_flags: <defaults>
</compile_context>

<pallas_src>
import functools

import jax
import jax.numpy as jnp
from jax import lax
from jax.experimental import pallas as pl
from jax.experimental.pallas import tpu as pltpu

IGNORE_INDEX = -100
_MIB = 1024 * 1024


def _round_up(x, m):
    return ((x + m - 1) // m) * m


# --------------------------------------------------------------------------------------
# Kernel
# --------------------------------------------------------------------------------------
def _lm_head_loss_kernel(h_ref, w_ref, lbl_ref, nll_ref,
                         m_ref, l_ref, picked_ref, *, vocab_size, mask_vocab_tail):
    """One grid step = (token tile i, vocab block j); vocab is the streamed reduction axis.

    h_ref:      [T, H]    bf16 hidden tile (same block across the vocab axis -> DMA'd once)
    w_ref:      [Vt, H]   bf16 lm_head weight block (PyTorch [V, H] layout, contiguous DMA)
    lbl_ref:    [T, 1]    int32 shifted labels for this token tile
    nll_ref:    [T, 1]    fp32 per-token NLL (written at the last vocab step)
    m_ref/l_ref/picked_ref: [T, 1] fp32 VMEM scratch: running max, running sum(exp), picked logit
    """
    j = pl.program_id(1)

    @pl.when(j == 0)
    def _():
        m_ref[...] = jnp.full_like(m_ref, -jnp.inf)
        l_ref[...] = jnp.zeros_like(l_ref)
        picked_ref[...] = jnp.zeros_like(picked_ref)

    # [T, Vt] fp32 logits block: contract the hidden dim of both operands, so the weight is
    # consumed directly in its [V, H] layout (no transposed copy ever materialized in HBM).
    logits = lax.dot_general(h_ref[...], w_ref[...],
                             dimension_numbers=(((1,), (1,)), ((), ())),
                             preferred_element_type=jnp.float32)

    v_tile = logits.shape[1]
    labels = lbl_ref[...]                                               # [T, 1] int32
    vocab_iota = lax.broadcasted_iota(jnp.int32, logits.shape, 1) + j * v_tile

    if mask_vocab_tail:
        # Only emitted when V was actually padded up to a multiple of the vocab tile.
        logits = jnp.where(vocab_iota < vocab_size, logits, -1e30)

    # Gather the logit at the label index via a one-hot mask restricted to THIS vocab block.
    # (ignore_index = -100 never matches any vocab position, so it contributes 0 here.)
    picked_ref[...] += jnp.sum(jnp.where(vocab_iota == labels, logits, 0.0),
                               axis=-1, keepdims=True)

    # Online (flash-style) log-sum-exp over the streamed vocab blocks.
    m_prev = m_ref[...]
    m_new = jnp.maximum(m_prev, jnp.max(logits, axis=-1, keepdims=True))
    alpha = jnp.exp(m_prev - m_new)
    l_ref[...] = alpha * l_ref[...] + jnp.sum(jnp.exp(logits - m_new),
                                              axis=-1, keepdims=True)
    m_ref[...] = m_new

    @pl.when(j == pl.num_programs(1) - 1)
    def _():
        lse = m_ref[...] + jnp.log(l_ref[...])                          # [T, 1]
        valid = lbl_ref[...] != IGNORE_INDEX
        nll_ref[...] = jnp.where(valid, lse - picked_ref[...], 0.0)     # per-token NLL partials


# --------------------------------------------------------------------------------------
# Generation-aware configuration + one-time weight preparation (outside the hot path)
# --------------------------------------------------------------------------------------
def _vmem_working_set_bytes(t, vt, hidden_size):
    """Rough double-buffered working-set estimate for the fit check."""
    return (2 * vt * hidden_size * 2      # weight blocks (bf16, double-buffered)
            + 2 * t * hidden_size * 2     # hidden tiles  (bf16, double-buffered)
            + 4 * t * vt * 4              # fp32 logits block + elementwise temporaries
            + 3 * t * 4                   # m / l / picked scratch
            + 4 * t * 4)                  # labels + output blocks


def lm_head_loss_config(num_shift_tokens, vocab_size, hidden_size):
    """Pick (tile_tokens, vocab_tile, vmem_limit_bytes) per TPU generation.

    v5e / v6e (128 MiB VMEM): t=512, vt=2048, ~100 MiB scoped limit.
    v7x (64 MiB per-TC VMEM, megacore doubles the weight stream): t=512, vt=1024, ~56 MiB.
    """
    try:
        vmem_cap = int(pltpu.get_tpu_info().vmem_capacity_bytes)
    except Exception:
        vmem_cap = 64 * _MIB  # conservative fallback if the query is unavailable

    if vmem_cap >= 96 * _MIB:            # v5e / v6e class
        t, vt = 512, 2048
        vmem_limit = int(min(vmem_cap - 28 * _MIB, 100 * _MIB))
    else:                                # v7x class
        t, vt = 512, 1024
        vmem_limit = int(min(vmem_cap - 8 * _MIB, 56 * _MIB))

    # Do not blow tiles far past the actual problem size (keeps padding overhead bounded).
    t = min(t, _round_up(max(num_shift_tokens, 1), 256))
    vt = min(vt, _round_up(max(vocab_size, 1), 512))

    # Shrink tiles if the double-buffered working set would not fit the scoped VMEM limit
    # (e.g. very large hidden sizes).
    while vt > 512 and _vmem_working_set_bytes(t, vt, hidden_size) > 0.9 * vmem_limit:
        vt = max(512, vt // 2)
    while t > 256 and _vmem_working_set_bytes(t, vt, hidden_size) > 0.9 * vmem_limit:
        t = max(256, t // 2)
    return int(t), int(vt), int(vmem_limit)


def prepare_lm_head_weight(lm_head_weight, vocab_tile):
    """One-time weight prep (bf16 cast + vocab padding), hoisted out of the per-step hot path.

    In production this is done once and the returned [V_pad, H] bf16 array is reused across
    training steps, removing a per-call HBM pass over the entire weight.
    """
    V, H = lm_head_weight.shape
    V_pad = _round_up(V, vocab_tile)
    w = lm_head_weight.astype(jnp.bfloat16)
    if V_pad != V:
        w = jnp.pad(w, ((0, V_pad - V), (0, 0)))
    return w


# --------------------------------------------------------------------------------------
# Jitted hot path
# --------------------------------------------------------------------------------------
@functools.partial(jax.jit, static_argnames=("vocab_size", "tile_tokens", "vocab_tile",
                                             "vmem_limit_bytes"))
def minis_lm_head_loss(hidden_states, labels, w_bf_padded, *,
                       vocab_size, tile_tokens, vocab_tile, vmem_limit_bytes):
    """JAX equivalent of LlamaForCausalLMWarpper.minis_processing (labels provided).

    hidden_states:  [B, Q, H] float32
    labels:         [B, Q]    int32 (-100 = ignore)
    w_bf_padded:    [V_pad, H] bfloat16 (from prepare_lm_head_weight, PyTorch [V, H] layout)
    Returns scalar fp32 loss = sum_i CE_sum(chunk_i) / count(shifted labels != -100).
    """
    B, Q, H = hidden_states.shape
    V_pad, H_w = w_bf_padded.shape
    t, vt = tile_tokens, vocab_tile
    assert H_w == H
    assert t % 8 == 0 and vt % 128 == 0
    assert V_pad % vt == 0 and V_pad >= vocab_size

    # Shift: predict token t+1 from hidden state t.  Sum of per-mini-chunk CE sums equals the
    # sum over all shifted tokens, so one token-tiled kernel covers every mini chunk
    # (exact equivalence to the PyTorch loop requires q_len % mini_s <= 1, as in the demo).
    # bf16 cast fused with the slice/reshape -> a single N x H copy.
    h_bf = hidden_states[:, :-1, :].astype(jnp.bfloat16).reshape(-1, H)   # [N, H]
    lbl = labels[:, 1:].reshape(-1).astype(jnp.int32)                     # [N]
    N = h_bf.shape[0]

    n_valid = jnp.sum(lbl != IGNORE_INDEX).astype(jnp.float32)

    # Pad ragged token counts (padded tokens get ignore_index -> contribute 0).
    N_pad = _round_up(N, t)
    if N_pad != N:
        h_bf = jnp.pad(h_bf, ((0, N_pad - N), (0, 0)))
        lbl = jnp.pad(lbl, (0, N_pad - N), constant_values=IGNORE_INDEX)
    lbl2 = lbl.reshape(-1, 1)

    num_token_tiles = N_pad // t
    num_vocab_tiles = V_pad // vt
    mask_vocab_tail = (V_pad != vocab_size)   # static: mask is elided when V % vt == 0

    # Advisory cost estimate: weight is re-streamed once per token tile.
    cost = pl.CostEstimate(
        flops=2 * N_pad * V_pad * H,
        transcendentals=N_pad * V_pad,
        bytes_accessed=(num_token_tiles * V_pad * H * 2     # weight stream
                        + N_pad * H * 2                     # hidden
                        + N_pad * 4                         # labels
                        + N_pad * 4))                       # nll out

    nll = pl.pallas_call(
        functools.partial(_lm_head_loss_kernel,
                          vocab_size=vocab_size, mask_vocab_tail=mask_vocab_tail),
        out_shape=jax.ShapeDtypeStruct((N_pad, 1), jnp.float32),
        grid_spec=pltpu.PrefetchScalarGridSpec(
            num_scalar_prefetch=0,
            grid=(num_token_tiles, num_vocab_tiles),
            in_specs=[
                pl.BlockSpec((t, H), lambda i, j: (i, 0)),      # hidden tile (reused across vocab)
                pl.BlockSpec((vt, H), lambda i, j: (j, 0)),     # streamed weight block [Vt, H]
                pl.BlockSpec((t, 1), lambda i, j: (i, 0)),      # label tile
            ],
            out_specs=pl.BlockSpec((t, 1), lambda i, j: (i, 0)),  # per-token NLL partials
            scratch_shapes=[
                pltpu.VMEM((t, 1), jnp.float32),                # running max m
                pltpu.VMEM((t, 1), jnp.float32),                # running sum l
                pltpu.VMEM((t, 1), jnp.float32),                # picked logit
            ],
        ),
        compiler_params=pltpu.CompilerParams(
            dimension_semantics=("parallel", "arbitrary"),      # token tiles megacore-shardable
            vmem_limit_bytes=int(vmem_limit_bytes)),
        cost_estimate=cost,
    )(h_bf, w_bf_padded, lbl2)

    return jnp.sum(nll) / n_valid


# --------------------------------------------------------------------------------------
# Pure-JAX reference
# --------------------------------------------------------------------------------------
def _reference_loss(hidden_states, labels, lm_head_weight):
    """Pure-JAX reference with the same (bf16 matmul, fp32 accumulate/loss) precision."""
    B, Q, H = hidden_states.shape
    h = hidden_states[:, :-1, :].reshape(-1, H).astype(jnp.bfloat16)
    w = lm_head_weight.astype(jnp.bfloat16)
    lbl = labels[:, 1:].reshape(-1)
    logits = lax.dot_general(h, w, dimension_numbers=(((1,), (1,)), ((), ())),
                             preferred_element_type=jnp.float32)
    logp = jax.nn.log_softmax(logits, axis=-1)
    safe_lbl = jnp.where(lbl == IGNORE_INDEX, 0, lbl)
    nll = -jnp.take_along_axis(logp, safe_lbl[:, None], axis=-1)[:, 0]
    valid = lbl != IGNORE_INDEX
    return jnp.sum(jnp.where(valid, nll, 0.0)) / jnp.sum(valid).astype(jnp.float32)


if __name__ == "__main__":
    # Small synthetic shapes. Q chosen so that mini_s chunks (mini_s=4, tmp=Q//mini_s=64)
    # cover exactly the Q-1 shifted tokens, matching the PyTorch loop coverage.
    B, Q, H = 2, 257, 128

    key = jax.random.PRNGKey(0)
    k_h, k_w, k_l, k_m = jax.random.split(key, 4)

    hidden_states = jax.random.normal(k_h, (B, Q, H), dtype=jnp.float32) * 0.5

    # ---- Case 1: V is a multiple of the vocab tile -> padded-tail mask statically elided.
    # Explicit small tiles so the multi-step vocab streaming / online-LSE path is exercised.
    V1 = 1024
    w1 = jax.random.normal(k_w, (V1, H), dtype=jnp.float32) * 0.02
    labels1 = jax.random.randint(k_l, (B, Q), 0, V1, dtype=jnp.int32)
    ignore_mask = jax.random.uniform(k_m, (B, Q)) < 0.1
    labels1 = jnp.where(ignore_mask, IGNORE_INDEX, labels1)

    t1, vt1 = 256, 256
    w1_prep = prepare_lm_head_weight(w1, vt1)          # hoisted one-time prep
    loss1 = minis_lm_head_loss(hidden_states, labels1, w1_prep,
                               vocab_size=V1, tile_tokens=t1, vocab_tile=vt1,
                               vmem_limit_bytes=32 * _MIB)
    loss1 = jax.block_until_ready(loss1)
    ref1 = jax.block_until_ready(_reference_loss(hidden_states, labels1, w1))
    assert jnp.allclose(loss1, ref1, rtol=1e-4, atol=1e-4), (loss1, ref1)

    # ---- Case 2: ragged V (not a tile multiple) with the generation-aware auto config.
    V2 = 1000
    w2 = w1[:V2]
    labels2 = jnp.where(labels1 >= V2, IGNORE_INDEX, labels1)   # keep labels inside [0, V2)

    N_shift = B * (Q - 1)
    t2, vt2, vmem_limit2 = lm_head_loss_config(N_shift, V2, H)
    w2_prep = prepare_lm_head_weight(w2, vt2)
    loss2 = jax.block_until_ready(
        minis_lm_head_loss(hidden_states, labels2, w2_prep,
                           vocab_size=V2, tile_tokens=t2, vocab_tile=vt2,
                           vmem_limit_bytes=vmem_limit2))
    ref2 = jax.block_until_ready(_reference_loss(hidden_states, labels2, w2))
    assert jnp.allclose(loss2, ref2, rtol=1e-4, atol=1e-4), (loss2, ref2)

    print("KERNEL_OK")
</pallas_src>

<mosaic_0001>
module attributes {stable_mosaic.version = 11 : i64} {
  func.func @_lm_head_loss_kernel(%arg0: i32, %arg1: i32, %arg2: memref<256x128xbf16, #tpu.memory_space<vmem>>, %arg3: memref<256x128xbf16, #tpu.memory_space<vmem>>, %arg4: memref<256x1xi32, #tpu.memory_space<vmem>>, %arg5: memref<256x1xf32, #tpu.memory_space<vmem>>, %arg6: memref<256x1xf32, #tpu.memory_space<vmem>>, %arg7: memref<256x1xf32, #tpu.memory_space<vmem>>, %arg8: memref<256x1xf32, #tpu.memory_space<vmem>>) attributes {dimension_semantics = [#tpu.dimension_semantics<parallel>, #tpu.dimension_semantics<arbitrary>], iteration_bounds = array<i64: 2, 4>, scalar_prefetch = 0 : i64, scratch_operands = 3 : i64, tpu.core_type = #tpu.core_type<tc>, window_params = [{transform_indices = @transform_0, window_bounds = array<i64: 256, 128>}, {transform_indices = @transform_1, window_bounds = array<i64: 256, 128>}, {transform_indices = @transform_2, window_bounds = array<i64: 256, 1>}, {transform_indices = @transform_3, window_bounds = array<i64: 256, 1>}]} {
    %c0_i32 = arith.constant 0 : i32
    %0 = arith.cmpi eq, %arg1, %c0_i32 : i32
    %1 = arith.extui %0 : i1 to i32
    %c0_i32_0 = arith.constant 0 : i32
    %2 = arith.cmpi ne, %1, %c0_i32_0 : i32
    scf.if %2 {
      %cst_23 = arith.constant 0xFF800000 : f32
      %39 = vector.broadcast %cst_23 : f32 to vector<256x1xf32>
      %c0_24 = arith.constant 0 : index
      %c0_25 = arith.constant 0 : index
      %40 = vector.load %arg6[%c0_24, %c0_25] : memref<256x1xf32, #tpu.memory_space<vmem>>, vector<256x1xf32>
      tpu.vector_store %arg6[%c0_24, %c0_25], %39 {strides = array<i32>} : memref<256x1xf32, #tpu.memory_space<vmem>>, vector<256x1xf32>,
      %cst_26 = arith.constant 0.000000e+00 : f32
      %41 = vector.broadcast %cst_26 : f32 to vector<256x1xf32>
      %c0_27 = arith.constant 0 : index
      %c0_28 = arith.constant 0 : index
      %42 = vector.load %arg7[%c0_27, %c0_28] : memref<256x1xf32, #tpu.memory_space<vmem>>, vector<256x1xf32>
      tpu.vector_store %arg7[%c0_27, %c0_28], %41 {strides = array<i32>} : memref<256x1xf32, #tpu.memory_space<vmem>>, vector<256x1xf32>,
      %cst_29 = arith.constant 0.000000e+00 : f32
      %43 = vector.broadcast %cst_29 : f32 to vector<256x1xf32>
      %c0_30 = arith.constant 0 : index
      %c0_31 = arith.constant 0 : index
      %44 = vector.load %arg8[%c0_30, %c0_31] : memref<256x1xf32, #tpu.memory_space<vmem>>, vector<256x1xf32>
      tpu.vector_store %arg8[%c0_30, %c0_31], %43 {strides = array<i32>} : memref<256x1xf32, #tpu.memory_space<vmem>>, vector<256x1xf32>,
    } else {
    }
    %c0 = arith.constant 0 : index
    %c0_1 = arith.constant 0 : index
    %3 = vector.load %arg2[%c0, %c0_1] : memref<256x128xbf16, #tpu.memory_space<vmem>>, vector<256x128xbf16>
    %c0_2 = arith.constant 0 : index
    %c0_3 = arith.constant 0 : index
    %4 = vector.load %arg3[%c0_2, %c0_3] : memref<256x128xbf16, #tpu.memory_space<vmem>>, vector<256x128xbf16>
    %cst = arith.constant dense<0.000000e+00> : vector<256x256xf32>
    %5 = tpu.matmul %3, %4, %cst {dimension_numbers = #tpu.dot_dimension_numbers<[1], [1], [0], [0], [0, 0, 1, 0], [], []>} : vector<256x128xbf16>, vector<256x128xbf16>, vector<256x256xf32> -> vector<256x256xf32>
    %c0_4 = arith.constant 0 : index
    %c0_5 = arith.constant 0 : index
    %6 = vector.load %arg4[%c0_4, %c0_5] : memref<256x1xi32, #tpu.memory_space<vmem>>, vector<256x1xi32>
    %7 = tpu.iota {dimensions = array<i32: 1>} : vector<256x256xi32>
    %c256_i32 = arith.constant 256 : i32
    %8 = arith.muli %arg1, %c256_i32 : i32
    %9 = vector.broadcast %8 : i32 to vector<256x256xi32>
    %10 = arith.addi %7, %9 : vector<256x256xi32>
    %c0_6 = arith.constant 0 : index
    %c0_7 = arith.constant 0 : index
    %11 = vector.load %arg8[%c0_6, %c0_7] : memref<256x1xf32, #tpu.memory_space<vmem>>, vector<256x1xf32>
    %12 = vector.broadcast %6 : vector<256x1xi32> to vector<256x256xi32>
    %13 = arith.cmpi eq, %10, %12 : vector<256x256xi32>
    %cst_8 = arith.constant 0.000000e+00 : f32
    %14 = vector.broadcast %cst_8 : f32 to vector<256x256xf32>
    %15 = arith.select %13, %5, %14 : vector<256x256xi1>, vector<256x256xf32>
    %cst_9 = arith.constant dense<0.000000e+00> : vector<256xf32>
    %16 = vector.multi_reduction <add>, %15, %cst_9 [1] : vector<256x256xf32> to vector<256xf32>
    %17 = vector.shape_cast %16 : vector<256xf32> to vector<256x1xf32>
    %18 = arith.addf %11, %17 : vector<256x1xf32>
    %c0_10 = arith.constant 0 : index
    %c0_11 = arith.constant 0 : index
    %19 = vector.load %arg8[%c0_10, %c0_11] : memref<256x1xf32, #tpu.memory_space<vmem>>, vector<256x1xf32>
    tpu.vector_store %arg8[%c0_10, %c0_11], %18 {strides = array<i32>} : memref<256x1xf32, #tpu.memory_space<vmem>>, vector<256x1xf32>,
    %c0_12 = arith.constant 0 : index
    %c0_13 = arith.constant 0 : index
    %20 = vector.load %arg6[%c0_12, %c0_13] : memref<256x1xf32, #tpu.memory_space<vmem>>, vector<256x1xf32>
    %cst_14 = arith.constant dense<0xFF800000> : vector<256xf32>
    %21 = vector.multi_reduction <maximumf>, %5, %cst_14 [1] : vector<256x256xf32> to vector<256xf32>
    %22 = vector.shape_cast %21 : vector<256xf32> to vector<256x1xf32>
    %23 = arith.maximumf %20, %22 : vector<256x1xf32>
    %24 = arith.subf %20, %23 : vector<256x1xf32>
    %25 = math.exp %24 : vector<256x1xf32>
    %c0_15 = arith.constant 0 : index
    %c0_16 = arith.constant 0 : index
    %26 = vector.load %arg7[%c0_15, %c0_16] : memref<256x1xf32, #tpu.memory_space<vmem>>, vector<256x1xf32>
    %27 = arith.mulf %25, %26 : vector<256x1xf32>
    %28 = vector.broadcast %23 : vector<256x1xf32> to vector<256x256xf32>
    %29 = arith.subf %5, %28 : vector<256x256xf32>
    %30 = math.exp %29 : vector<256x256xf32>
    %cst_17 = arith.constant dense<0.000000e+00> : vector<256xf32>
    %31 = vector.multi_reduction <add>, %30, %cst_17 [1] : vector<256x256xf32> to vector<256xf32>
    %32 = vector.shape_cast %31 : vector<256xf32> to vector<256x1xf32>
    %33 = arith.addf %27, %32 : vector<256x1xf32>
    %c0_18 = arith.constant 0 : index
    %c0_19 = arith.constant 0 : index
    %34 = vector.load %arg7[%c0_18, %c0_19] : memref<256x1xf32, #tpu.memory_space<vmem>>, vector<256x1xf32>
    tpu.vector_store %arg7[%c0_18, %c0_19], %33 {strides = array<i32>} : memref<256x1xf32, #tpu.memory_space<vmem>>, vector<256x1xf32>,
    %c0_20 = arith.constant 0 : index
    %c0_21 = arith.constant 0 : index
    %35 = vector.load %arg6[%c0_20, %c0_21] : memref<256x1xf32, #tpu.memory_space<vmem>>, vector<256x1xf32>
    tpu.vector_store %arg6[%c0_20, %c0_21], %23 {strides = array<i32>} : memref<256x1xf32, #tpu.memory_space<vmem>>, vector<256x1xf32>,
    %c3_i32 = arith.constant 3 : i32
    %36 = arith.cmpi eq, %arg1, %c3_i32 : i32
    %37 = arith.extui %36 : i1 to i32
    %c0_i32_22 = arith.constant 0 : i32
    %38 = arith.cmpi ne, %37, %c0_i32_22 : i32
    scf.if %38 {
      %c0_23 = arith.constant 0 : index
      %c0_24 = arith.constant 0 : index
      %39 = vector.load %arg6[%c0_23, %c0_24] : memref<256x1xf32, #tpu.memory_space<vmem>>, vector<256x1xf32>
      %c0_25 = arith.constant 0 : index
      %c0_26 = arith.constant 0 : index
      %40 = vector.load %arg7[%c0_25, %c0_26] : memref<256x1xf32, #tpu.memory_space<vmem>>, vector<256x1xf32>
      %41 = math.log %40 : vector<256x1xf32>
      %42 = arith.addf %39, %41 : vector<256x1xf32>
      %c0_27 = arith.constant 0 : index
      %c0_28 = arith.constant 0 : index
      %43 = vector.load %arg4[%c0_27, %c0_28] : memref<256x1xi32, #tpu.memory_space<vmem>>, vector<256x1xi32>
      %c-100_i32 = arith.constant -100 : i32
      %44 = vector.broadcast %c-100_i32 : i32 to vector<256x1xi32>
      %45 = arith.cmpi ne, %43, %44 : vector<256x1xi32>
      %c0_29 = arith.constant 0 : index
      %c0_30 = arith.constant 0 : index
      %46 = vector.load %arg8[%c0_29, %c0_30] : memref<256x1xf32, #tpu.memory_space<vmem>>, vector<256x1xf32>
      %47 = arith.subf %42, %46 : vector<256x1xf32>
      %cst_31 = arith.constant 0.000000e+00 : f32
      %48 = vector.broadcast %cst_31 : f32 to vector<256x1xf32>
      %49 = arith.select %45, %47, %48 : vector<256x1xi1>, vector<256x1xf32>
      %c0_32 = arith.constant 0 : index
      %c0_33 = arith.constant 0 : index
      %50 = vector.load %arg5[%c0_32, %c0_33] : memref<256x1xf32, #tpu.memory_space<vmem>>, vector<256x1xf32>
      tpu.vector_store %arg5[%c0_32, %c0_33], %49 {strides = array<i32>} : memref<256x1xf32, #tpu.memory_space<vmem>>, vector<256x1xf32>,
    } else {
    }
    return
  }
  func.func @transform_0(%arg0: i32, %arg1: i32) -> (i32, i32) {
    %c0_i32 = arith.constant 0 : i32
    %c0_i32_0 = arith.constant 0 : i32
    return %arg0, %c0_i32 : i32, i32
  }
  func.func @transform_1(%arg0: i32, %arg1: i32) -> (i32, i32) {
    %c0_i32 = arith.constant 0 : i32
    %c0_i32_0 = arith.constant 0 : i32
    return %arg1, %c0_i32 : i32, i32
  }
  func.func @transform_2(%arg0: i32, %arg1: i32) -> (i32, i32) {
    %c0_i32 = arith.constant 0 : i32
    %c0_i32_0 = arith.constant 0 : i32
    return %arg0, %c0_i32 : i32, i32
  }
  func.func @transform_3(%arg0: i32, %arg1: i32) -> (i32, i32) {
    %c0_i32 = arith.constant 0 : i32
    %c0_i32_0 = arith.constant 0 : i32
    return %arg0, %c0_i32 : i32, i32
  }
}

</mosaic_0001>

<llo_original>
// kernel: minis_lm_head_loss.1
$region0: #{minis_lm_head_loss.1}
  #allocation0 [shape = 'u32[]', space=smem, size = 0x4, offset = 0x4, fixed_abs, tag = 'smem constant byte address 0x4 - core index']
  #allocation1 [shape = 'u32[72,128]{1,0:T(1,128)}', space=vmem, size = 0x9000, scoped, tag = 'internal scratch']
  #allocation2 [shape = 'f32[256,1]{1,0:T(8,128)}', space=vmem, size = 0x20000, scoped, tag = 'scratch operand']
  #allocation3 [shape = 'f32[256,1]{1,0:T(8,128)}', space=vmem, size = 0x20000, scoped, tag = 'scratch operand']
  #allocation4 [shape = 'f32[256,1]{1,0:T(8,128)}', space=vmem, size = 0x20000, scoped, tag = 'scratch operand']
  %s0 = inlined_call_operand.vmem [shape: bf16[512,128], index: 0, kind: input, shape index: {}]
  %s1 = inlined_call_operand.vmem [shape: bf16[1024,128], index: 1, kind: input, shape index: {}]
  %s2 = inlined_call_operand.vmem [shape: s32[512,1], index: 2, kind: input, shape index: {}]
  %s3 = inlined_call_operand.vmem [shape: f32[512,1], index: 3, kind: output, shape index: {}]
  %s4 = sld [smem:[#allocation0]]
  $region53: #{minis_lm_head_loss.1} parent=0
    _
  %s6 = ssub.s32 1, %s4
  %s7 = scalar_select 0, %s6, %s4
  loop: start=0, step=1, limit=10
  $region2: #{minis_lm_head_loss.1} parent=0 // loop_pre_header
    _
  $region3: #{minis_lm_head_loss.1} parent=0 // loop_header
    %s9 = sphi 0, %s13
    %p10 = scmp.ge.s32.totalorder %s9, 10
    %s16 = sphi 0, %s28
    %s17 = sphi 0, %s24
    %s18 = sphi 0, %s16
    %s19 = sphi 0, %s17
    %s20 = sphi 0, %s18
    %s21 = sphi 0, %s19
    %s31 = sphi 0, %s33
    %s34 = sphi 0, %s31
    %s35 = sphi 0, %s34
    %s51 = sphi 0, %s35
    %s57 = sphi 0, %s59
    %s60 = sphi 0, %s57
    %s61 = sphi 0, %s60
    %s77 = sphi 0, %s61
    %s83 = sphi 0, %s85
    %s86 = sphi 0, %s83
    %s87 = sphi 0, %s86
    %s103 = sphi 0, %s87
    %s109 = sphi 0, %s111
    %s112 = sphi 0, %s109
    %s113 = sphi 0, %s112
    %s129 = sphi 0, %s113
  $region4: #{minis_lm_head_loss.1} parent=0 // loop_header_branch
    %12 = sbr.rel (%p10) target = $region8
  $region5: #{minis_lm_head_loss.1} parent=0 // loop_body
    %s14 = ssub.s32 %s9, 1
    %s15 = ssub.s32 %s9, 2
    %s22 = sadd.s32 1, %s17
    %p23 = scmp.ge.s32.totalorder %s22, 4
    %s24 = scalar_select %p23, 0, %s22
    %s25 = sadd.s32 1, %s16
    %s26 = scalar_select %p23, %s25, %s16
    %p27 = scmp.ge.s32.totalorder %s26, 2
    %s28 = scalar_select %p27, 0, %s26
    %s29 = ssub.s32 %s16, %s28
    %p30 = scmp.eq.s32.totalorder %s29, 0
    %s32 = sadd.s32 %s31, 1
    %s33 = scalar_select %p30, %s31, %s32
    %p36 = pneg %p30
    %p37 = scmp.eq.s32.totalorder %s9, 7
    %p38 = por %p36, %p37
    %p39 = scmp.ne.s32.totalorder %s31, %s34
    %p40 = scmp.eq.s32.totalorder %s9, 0
    %p41 = por %p39, %p40
    %p42 = scmp.ne.s32.totalorder %s31, %s34
    %p43 = scmp.eq.s32.totalorder %s14, 7
    %p44 = por %p42, %p43
    %p45 = scmp.ne.s32.totalorder %s34, %s35
    %p46 = scmp.eq.s32.totalorder %s14, 0
    %p47 = por %p45, %p46
    %p48 = scmp.ne.s32.totalorder %s34, %s35
    %p49 = scmp.eq.s32.totalorder %s15, 7
    %p50 = por %p48, %p49
    %p52 = scmp.ne.s32.totalorder %s35, %s51
    %p53 = scmp.eq.s32.totalorder %s15, 0
    %p54 = por %p52, %p53
    %s55 = ssub.s32 %s17, %s24
    %p56 = scmp.eq.s32.totalorder %s55, 0
    %s58 = sadd.s32 %s57, 1
    %s59 = scalar_select %p56, %s57, %s58
    %p62 = pneg %p56
    %p63 = scmp.eq.s32.totalorder %s9, 7
    %p64 = por %p62, %p63
    %p65 = scmp.ne.s32.totalorder %s57, %s60
    %p66 = scmp.eq.s32.totalorder %s9, 0
    %p67 = por %p65, %p66
    %p68 = scmp.ne.s32.totalorder %s57, %s60
    %p69 = scmp.eq.s32.totalorder %s14, 7
    %p70 = por %p68, %p69
    %p71 = scmp.ne.s32.totalorder %s60, %s61
    %p72 = scmp.eq.s32.totalorder %s14, 0
    %p73 = por %p71, %p72
    %p74 = scmp.ne.s32.totalorder %s60, %s61
    %p75 = scmp.eq.s32.totalorder %s15, 7
    %p76 = por %p74, %p75
    %p78 = scmp.ne.s32.totalorder %s61, %s77
    %p79 = scmp.eq.s32.totalorder %s15, 0
    %p80 = por %p78, %p79
    %s81 = ssub.s32 %s16, %s28
    %p82 = scmp.eq.s32.totalorder %s81, 0
    %s84 = sadd.s32 %s83, 1
    %s85 = scalar_select %p82, %s83, %s84
    %p88 = pneg %p82
    %p89 = scmp.eq.s32.totalorder %s9, 7
    %p90 = por %p88, %p89
    %p91 = scmp.ne.s32.totalorder %s83, %s86
    %p92 = scmp.eq.s32.totalorder %s9, 0
    %p93 = por %p91, %p92
    %p94 = scmp.ne.s32.totalorder %s83, %s86
    %p95 = scmp.eq.s32.totalorder %s14, 7
    %p96 = por %p94, %p95
    %p97 = scmp.ne.s32.totalorder %s86, %s87
    %p98 = scmp.eq.s32.totalorder %s14, 0
    %p99 = por %p97, %p98
    %p100 = scmp.ne.s32.totalorder %s86, %s87
    %p101 = scmp.eq.s32.totalorder %s15, 7
    %p102 = por %p100, %p101
    %p104 = scmp.ne.s32.totalorder %s87, %s103
    %p105 = scmp.eq.s32.totalorder %s15, 0
    %p106 = por %p104, %p105
    %s107 = ssub.s32 %s16, %s28
    %p108 = scmp.eq.s32.totalorder %s107, 0
    %s110 = sadd.s32 %s109, 1
    %s111 = scalar_select %p108, %s109, %s110
    %p114 = pneg %p108
    %p115 = scmp.eq.s32.totalorder %s9, 7
    %p116 = por %p114, %p115
    %p117 = scmp.ne.s32.totalorder %s109, %s112
    %p118 = scmp.eq.s32.totalorder %s9, 0
    %p119 = por %p117, %p118
    %p120 = scmp.ne.s32.totalorder %s109, %s112
    %p121 = scmp.eq.s32.totalorder %s14, 7
    %p122 = por %p120, %p121
    %p123 = scmp.ne.s32.totalorder %s112, %s113
    %p124 = scmp.eq.s32.totalorder %s14, 0
    %p125 = por %p123, %p124
    %p126 = scmp.ne.s32.totalorder %s112, %s113
    %p127 = scmp.eq.s32.totalorder %s15, 7
    %p128 = por %p126, %p127
    %p130 = scmp.ne.s32.totalorder %s113, %s129
    %p131 = scmp.eq.s32.totalorder %s15, 0
    %p132 = por %p130, %p131
    %p133 = scmp.le.s32.totalorder 1, %s9
    %p134 = scmp.lt.s32.totalorder %s9, 9
    %p135 = pnand %p133, %p134
    %p136 = pneg %p135
    // Predicated region
    $region9: #{minis_lm_head_loss.1} parent=5 // pred_check
      _
    $region10: #{minis_lm_head_loss.1} parent=5 // pred_check_branch
      %138 = sbr.rel (%p135) target = $region12
    $region11: #{minis_lm_head_loss.1} parent=5 // pred_region
      %s139 = ssub.s32 %s9, 1
    $region12: #{minis_lm_head_loss.1} parent=5 // pred_fallthru
      _
    %p140 = scmp.lt.s32.totalorder %s9, 8
    // Predicated region
    $region13: #{minis_lm_head_loss.1} parent=5 // pred_check
      %p141 = pneg %p140
    $region14: #{minis_lm_head_loss.1} parent=5 // pred_check_branch
      %143 = sbr.rel (%p141) target = $region16
    $region15: #{minis_lm_head_loss.1} parent=5 // pred_region
      // Predicated region
      $region17: #{minis_lm_head_loss.1} parent=15 // pred_check
        %p144 = pneg %p41
      $region18: #{minis_lm_head_loss.1} parent=15 // pred_check_branch
        %146 = sbr.rel (%p144) target = $region20
      $region19: #{minis_lm_head_loss.1} parent=15 // pred_region
        %s147 = smul.u32 32, %s16
        %p148 = scmp.lt.s32.totalorder %s147, 63
        %s149 = scalar_select %p148, %s147, 63
        %s150 = smul.addr %s149, 4
        %s151 = scalar_lea.vmem %s0, %s150
        %s152 = smul.u32 32, %s16
      $region20: #{minis_lm_head_loss.1} parent=15 // pred_fallthru
        _
      // Predicated region
      $region21: #{minis_lm_head_loss.1} parent=15 // pred_check
        %p153 = pneg %p67
      $region22: #{minis_lm_head_loss.1} parent=15 // pred_check_branch
        %155 = sbr.rel (%p153) target = $region24
      $region23: #{minis_lm_head_loss.1} parent=15 // pred_region
        %s156 = smul.u32 32, %s17
        %p157 = scmp.lt.s32.totalorder %s156, 127
        %s158 = scalar_select %p157, %s156, 127
        %s159 = smul.addr %s158, 4
        %s160 = scalar_lea.vmem %s1, %s159
        %s161 = smul.u32 32, %s17
      $region24: #{minis_lm_head_loss.1} parent=15 // pred_fallthru
        _
      // Predicated region
      $region25: #{minis_lm_head_loss.1} parent=15 // pred_check
        %p162 = pneg %p93
      $region26: #{minis_lm_head_loss.1} parent=15 // pred_check_branch
        %164 = sbr.rel (%p162) target = $region28
      $region27: #{minis_lm_head_loss.1} parent=15 // pred_region
        %s165 = smul.u32 32, %s16
        %p166 = scmp.lt.s32.totalorder %s165, 63
        %s167 = scalar_select %p166, %s165, 63
        %s168 = smul.addr %s167, 8
        %s169 = scalar_lea.vmem %s2, %s168
        %s170 = smul.u32 32, %s16
      $region28: #{minis_lm_head_loss.1} parent=15 // pred_fallthru
        _
    $region16: #{minis_lm_head_loss.1} parent=5 // pred_fallthru
      _
    %p171 = scmp.le.s32.totalorder 1, %s9
    %p172 = scmp.lt.s32.totalorder %s9, 9
    %p173 = pnand %p171, %p172
    %p174 = pneg %p173
    // Predicated region
    $region29: #{minis_lm_head_loss.1} parent=5 // pred_check
      _
    $region30: #{minis_lm_head_loss.1} parent=5 // pred_check_branch
      %176 = sbr.rel (%p173) target = $region32
    $region31: #{minis_lm_head_loss.1} parent=5 // pred_region
      %s177 = ssub.s32 %s9, 1
      %s178 = smul.u32 32, %s18
      %p179 = scmp.lt.s32.totalorder %s178, 63
      %s180 = scalar_select %p179, %s178, 63
      %s181 = smul.addr %s180, 4
      %s182 = scalar_lea.vmem %s0, %s181
      %p183 = pneg %p47
      %p184 = pneg %p44
      %s185 = smul.u32 32, %s19
      %p186 = scmp.lt.s32.totalorder %s185, 127
      %s187 = scalar_select %p186, %s185, 127
      %s188 = smul.addr %s187, 4
      %s189 = scalar_lea.vmem %s1, %s188
      %p190 = pneg %p73
      %p191 = pneg %p70
      %s192 = smul.u32 32, %s18
      %p193 = scmp.lt.s32.totalorder %s192, 63
      %s194 = scalar_select %p193, %s192, 63
      %s195 = smul.addr %s194, 8
      %s196 = scalar_lea.vmem %s2, %s195
      %p197 = pneg %p99
      %p198 = pneg %p96
      %p199 = pneg %p125
      %p200 = pneg %p122
      %s201 = smul.u32 32, %s18
      %p202 = scmp.lt.s32.totalorder %s201, 63
      %s203 = scalar_select %p202, %s201, 63
      %s204 = smul.addr %s203, 8
      %s205 = scalar_lea.vmem %s3, %s204
      %s206 = smul.u32 32, %s18
      %p207 = scmp.lt.s32.totalorder %s206, 63
      %s208 = scalar_select %p207, %s206, 63
      %s209 = smul.addr %s208, 4
      %s210 = scalar_lea.vmem %s0, %s209
      %s211 = smul.u32 32, %s18
      %s212 = smul.u32 32, %s19
      %p213 = scmp.lt.s32.totalorder %s212, 127
      %s214 = scalar_select %p213, %s212, 127
      %s215 = smul.addr %s214, 4
      %s216 = scalar_lea.vmem %s1, %s215
      %s217 = smul.u32 32, %s19
      %s218 = smul.u32 32, %s18
      %p219 = scmp.lt.s32.totalorder %s218, 63
      %s220 = scalar_select %p219, %s218, 63
      %s221 = smul.addr %s220, 8
      %s222 = scalar_lea.vmem %s2, %s221
      %s223 = smul.u32 32, %s18
      %s224 = smul.u32 32, %s18
      %p225 = scmp.lt.s32.totalorder %s224, 63
      %s226 = scalar_select %p225, %s224, 63
      %s227 = smul.addr %s226, 8
      %s228 = scalar_lea.vmem %s3, %s227
      %s229 = smul.u32 32, %s18
      %p230 = scmp.eq.s32.totalorder %s19, 0
      // Predicated region
      $region33: #{minis_lm_head_loss.1} parent=31 // pred_check
        %p231 = pneg %p230
      $region34: #{minis_lm_head_loss.1} parent=31 // pred_check_branch
        %233 = sbr.rel (%p231) target = $region36
      $region35: #{minis_lm_head_loss.1} parent=31 // pred_region
        %vm234 = vcmask 7168
        %235 = vst.msk [vmem:[#allocation2] sm:$0xff] %vm234, -inf
        %236 = vst.msk [vmem:[#allocation2 + $0x8] sm:$0xff] %vm234, -inf
        %237 = vst.msk [vmem:[#allocation2 + $0x10] sm:$0xff] %vm234, -inf
        %238 = vst.msk [vmem:[#allocation2 + $0x18] sm:$0xff] %vm234, -inf
        %239 = vst.msk [vmem:[#allocation2 + $0x20] sm:$0xff] %vm234, -inf
        %240 = vst.msk [vmem:[#allocation2 + $0x28] sm:$0xff] %vm234, -inf
        %241 = vst.msk [vmem:[#allocation2 + $0x30] sm:$0xff] %vm234, -inf
        %242 = vst.msk [vmem:[#allocation2 + $0x38] sm:$0xff] %vm234, -inf
        %243 = vst.msk [vmem:[#allocation2 + $0x40] sm:$0xff] %vm234, -inf
        %244 = vst.msk [vmem:[#allocation2 + $0x48] sm:$0xff] %vm234, -inf
        %245 = vst.msk [vmem:[#allocation2 + $0x50] sm:$0xff] %vm234, -inf
        %246 = vst.msk [vmem:[#allocation2 + $0x58] sm:$0xff] %vm234, -inf
        %247 = vst.msk [vmem:[#allocation2 + $0x60] sm:$0xff] %vm234, -inf
        %248 = vst.msk [vmem:[#allocation2 + $0x68] sm:$0xff] %vm234, -inf
        %249 = vst.msk [vmem:[#allocation2 + $0x70] sm:$0xff] %vm234, -inf
        %250 = vst.msk [vmem:[#allocation2 + $0x78] sm:$0xff] %vm234, -inf
        %251 = vst.msk [vmem:[#allocation2 + $0x80] sm:$0xff] %vm234, -inf
        %252 = vst.msk [vmem:[#allocation2 + $0x88] sm:$0xff] %vm234, -inf
        %253 = vst.msk [vmem:[#allocation2 + $0x90] sm:$0xff] %vm234, -inf
        %254 = vst.msk [vmem:[#allocation2 + $0x98] sm:$0xff] %vm234, -inf
        %255 = vst.msk [vmem:[#allocation2 + $0xa0] sm:$0xff] %vm234, -inf
        %256 = vst.msk [vmem:[#allocation2 + $0xa8] sm:$0xff] %vm234, -inf
        %257 = vst.msk [vmem:[#allocation2 + $0xb0] sm:$0xff] %vm234, -inf
        %258 = vst.msk [vmem:[#allocation2 + $0xb8] sm:$0xff] %vm234, -inf
        %259 = vst.msk [vmem:[#allocation2 + $0xc0] sm:$0xff] %vm234, -inf
        %260 = vst.msk [vmem:[#allocation2 + $0xc8] sm:$0xff] %vm234, -inf
        %261 = vst.msk [vmem:[#allocation2 + $0xd0] sm:$0xff] %vm234, -inf
        %262 = vst.msk [vmem:[#allocation2 + $0xd8] sm:$0xff] %vm234, -inf
        %263 = vst.msk [vmem:[#allocation2 + $0xe0] sm:$0xff] %vm234, -inf
        %264 = vst.msk [vmem:[#allocation2 + $0xe8] sm:$0xff] %vm234, -inf
        %265 = vst.msk [vmem:[#allocation2 + $0xf0] sm:$0xff] %vm234, -inf
        %266 = vst.msk [vmem:[#allocation2 + $0xf8] sm:$0xff] %vm234, -inf
        %267 = vst.msk [vmem:[#allocation3] sm:$0xff] %vm234, 0.0
        %268 = vst.msk [vmem:[#allocation3 + $0x8] sm:$0xff] %vm234, 0.0
        %269 = vst.msk [vmem:[#allocation3 + $0x10] sm:$0xff] %vm234, 0.0
        %270 = vst.msk [vmem:[#allocation3 + $0x18] sm:$0xff] %vm234, 0.0
        %271 = vst.msk [vmem:[#allocation3 + $0x20] sm:$0xff] %vm234, 0.0
        %272 = vst.msk [vmem:[#allocation3 + $0x28] sm:$0xff] %vm234, 0.0
        %273 = vst.msk [vmem:[#allocation3 + $0x30] sm:$0xff] %vm234, 0.0
        %274 = vst.msk [vmem:[#allocation3 + $0x38] sm:$0xff] %vm234, 0.0
        %275 = vst.msk [vmem:[#allocation3 + $0x40] sm:$0xff] %vm234, 0.0
        %276 = vst.msk [vmem:[#allocation3 + $0x48] sm:$0xff] %vm234, 0.0
        %277 = vst.msk [vmem:[#allocation3 + $0x50] sm:$0xff] %vm234, 0.0
        %278 = vst.msk [vmem:[#allocation3 + $0x58] sm:$0xff] %vm234, 0.0
        %279 = vst.msk [vmem:[#allocation3 + $0x60] sm:$0xff] %vm234, 0.0
        %280 = vst.msk [vmem:[#allocation3 + $0x68] sm:$0xff] %vm234, 0.0
        %281 = vst.msk [vmem:[#allocation3 + $0x70] sm:$0xff] %vm234, 0.0
        %282 = vst.msk [vmem:[#allocation3 + $0x78] sm:$0xff] %vm234, 0.0
        %283 = vst.msk [vmem:[#allocation3 + $0x80] sm:$0xff] %vm234, 0.0
        %284 = vst.msk [vmem:[#allocation3 + $0x88] sm:$0xff] %vm234, 0.0
        %285 = vst.msk [vmem:[#allocation3 + $0x90] sm:$0xff] %vm234, 0.0
        %286 = vst.msk [vmem:[#allocation3 + $0x98] sm:$0xff] %vm234, 0.0
        %287 = vst.msk [vmem:[#allocation3 + $0xa0] sm:$0xff] %vm234, 0.0
        %288 = vst.msk [vmem:[#allocation3 + $0xa8] sm:$0xff] %vm234, 0.0
        %289 = vst.msk [vmem:[#allocation3 + $0xb0] sm:$0xff] %vm234, 0.0
        %290 = vst.msk [vmem:[#allocation3 + $0xb8] sm:$0xff] %vm234, 0.0
        %291 = vst.msk [vmem:[#allocation3 + $0xc0] sm:$0xff] %vm234, 0.0
        %292 = vst.msk [vmem:[#allocation3 + $0xc8] sm:$0xff] %vm234, 0.0
        %293 = vst.msk [vmem:[#allocation3 + $0xd0] sm:$0xff] %vm234, 0.0
        %294 = vst.msk [vmem:[#allocation3 + $0xd8] sm:$0xff] %vm234, 0.0
        %295 = vst.msk [vmem:[#allocation3 + $0xe0] sm:$0xff] %vm234, 0.0
        %296 = vst.msk [vmem:[#allocation3 + $0xe8] sm:$0xff] %vm234, 0.0
        %297 = vst.msk [vmem:[#allocation3 + $0xf0] sm:$0xff] %vm234, 0.0
        %298 = vst.msk [vmem:[#allocation3 + $0xf8] sm:$0xff] %vm234, 0.0
        %299 = vst.msk [vmem:[#allocation4] sm:$0xff] %vm234, 0.0
        %300 = vst.msk [vmem:[#allocation4 + $0x8] sm:$0xff] %vm234, 0.0
        %301 = vst.msk [vmem:[#allocation4 + $0x10] sm:$0xff] %vm234, 0.0
        %302 = vst.msk [vmem:[#allocation4 + $0x18] sm:$0xff] %vm234, 0.0
        %303 = vst.msk [vmem:[#allocation4 + $0x20] sm:$0xff] %vm234, 0.0
        %304 = vst.msk [vmem:[#allocation4 + $0x28] sm:$0xff] %vm234, 0.0
        %305 = vst.msk [vmem:[#allocation4 + $0x30] sm:$0xff] %vm234, 0.0
        %306 = vst.msk [vmem:[#allocation4 + $0x38] sm:$0xff] %vm234, 0.0
        %307 = vst.msk [vmem:[#allocation4 + $0x40] sm:$0xff] %vm234, 0.0
        %308 = vst.msk [vmem:[#allocation4 + $0x48] sm:$0xff] %vm234, 0.0
        %309 = vst.msk [vmem:[#allocation4 + $0x50] sm:$0xff] %vm234, 0.0
        %310 = vst.msk [vmem:[#allocation4 + $0x58] sm:$0xff] %vm234, 0.0
        %311 = vst.msk [vmem:[#allocation4 + $0x60] sm:$0xff] %vm234, 0.0
        %312 = vst.msk [vmem:[#allocation4 + $0x68] sm:$0xff] %vm234, 0.0
        %313 = vst.msk [vmem:[#allocation4 + $0x70] sm:$0xff] %vm234, 0.0
        %314 = vst.msk [vmem:[#allocation4 + $0x78] sm:$0xff] %vm234, 0.0
        %315 = vst.msk [vmem:[#allocation4 + $0x80] sm:$0xff] %vm234, 0.0
        %316 = vst.msk [vmem:[#allocation4 + $0x88] sm:$0xff] %vm234, 0.0
        %317 = vst.msk [vmem:[#allocation4 + $0x90] sm:$0xff] %vm234, 0.0
        %318 = vst.msk [vmem:[#allocation4 + $0x98] sm:$0xff] %vm234, 0.0
        %319 = vst.msk [vmem:[#allocation4 + $0xa0] sm:$0xff] %vm234, 0.0
        %320 = vst.msk [vmem:[#allocation4 + $0xa8] sm:$0xff] %vm234, 0.0
        %321 = vst.msk [vmem:[#allocation4 + $0xb0] sm:$0xff] %vm234, 0.0
        %322 = vst.msk [vmem:[#allocation4 + $0xb8] sm:$0xff] %vm234, 0.0
        %323 = vst.msk [vmem:[#allocation4 + $0xc0] sm:$0xff] %vm234, 0.0
        %324 = vst.msk [vmem:[#allocation4 + $0xc8] sm:$0xff] %vm234, 0.0
        %325 = vst.msk [vmem:[#allocation4 + $0xd0] sm:$0xff] %vm234, 0.0
        %326 = vst.msk [vmem:[#allocation4 + $0xd8] sm:$0xff] %vm234, 0.0
        %327 = vst.msk [vmem:[#allocation4 + $0xe0] sm:$0xff] %vm234, 0.0
        %328 = vst.msk [vmem:[#allocation4 + $0xe8] sm:$0xff] %vm234, 0.0
        %329 = vst.msk [vmem:[#allocation4 + $0xf0] sm:$0xff] %vm234, 0.0
        %330 = vst.msk [vmem:[#allocation4 + $0xf8] sm:$0xff] %vm234, 0.0
      $region36: #{minis_lm_head_loss.1} parent=31 // pred_fallthru
        _
      %v331 = vld [vmem:[%s210] sm:$0xf]
      %v332 = vld [vmem:[%s210 + $0x4] sm:$0xf]
      %v333 = vld [vmem:[%s210 + $0x8] sm:$0xf]
      %v334 = vld [vmem:[%s210 + $0xc] sm:$0xf]
      %v335 = vld [vmem:[%s210 + $0x10] sm:$0xf]
      %v336 = vld [vmem:[%s210 + $0x14] sm:$0xf]
      %v337 = vld [vmem:[%s210 + $0x18] sm:$0xf]
      %v338 = vld [vmem:[%s210 + $0x1c] sm:$0xf]
      %v339 = vld [vmem:[%s210 + $0x20] sm:$0xf]
      %v340 = vld [vmem:[%s210 + $0x24] sm:$0xf]
      %v341 = vld [vmem:[%s210 + $0x28] sm:$0xf]
      %v342 = vld [vmem:[%s210 + $0x2c] sm:$0xf]
      %v343 = vld [vmem:[%s210 + $0x30] sm:$0xf]
      %v344 = vld [vmem:[%s210 + $0x34] sm:$0xf]
      %v345 = vld [vmem:[%s210 + $0x38] sm:$0xf]
      %v346 = vld [vmem:[%s210 + $0x3c] sm:$0xf]
      %v347 = vld [vmem:[%s210 + $0x40] sm:$0xf]
      %v348 = vld [vmem:[%s210 + $0x44] sm:$0xf]
      %v349 = vld [vmem:[%s210 + $0x48] sm:$0xf]
      %v350 = vld [vmem:[%s210 + $0x4c] sm:$0xf]
      %v351 = vld [vmem:[%s210 + $0x50] sm:$0xf]
      %v352 = vld [vmem:[%s210 + $0x54] sm:$0xf]
      %v353 = vld [vmem:[%s210 + $0x58] sm:$0xf]
      %v354 = vld [vmem:[%s210 + $0x5c] sm:$0xf]
      %v355 = vld [vmem:[%s210 + $0x60] sm:$0xf]
      %v356 = vld [vmem:[%s210 + $0x64] sm:$0xf]
      %v357 = vld [vmem:[%s210 + $0x68] sm:$0xf]
      %v358 = vld [vmem:[%s210 + $0x6c] sm:$0xf]
      %v359 = vld [vmem:[%s210 + $0x70] sm:$0xf]
      %v360 = vld [vmem:[%s210 + $0x74] sm:$0xf]
      %v361 = vld [vmem:[%s210 + $0x78] sm:$0xf]
      %v362 = vld [vmem:[%s210 + $0x7c] sm:$0xf]
      %v363 = vld [vmem:[%s216] sm:$0xf]
      %v364 = vld [vmem:[%s216 + $0x4] sm:$0xf]
      %v365 = vld [vmem:[%s216 + $0x8] sm:$0xf]
      %v366 = vld [vmem:[%s216 + $0xc] sm:$0xf]
      %v367 = vld [vmem:[%s216 + $0x10] sm:$0xf]
      %v368 = vld [vmem:[%s216 + $0x14] sm:$0xf]
      %v369 = vld [vmem:[%s216 + $0x18] sm:$0xf]
      %v370 = vld [vmem:[%s216 + $0x1c] sm:$0xf]
      %v371 = vld [vmem:[%s216 + $0x20] sm:$0xf]
      %v372 = vld [vmem:[%s216 + $0x24] sm:$0xf]
      %v373 = vld [vmem:[%s216 + $0x28] sm:$0xf]
      %v374 = vld [vmem:[%s216 + $0x2c] sm:$0xf]
      %v375 = vld [vmem:[%s216 + $0x30] sm:$0xf]
      %v376 = vld [vmem:[%s216 + $0x34] sm:$0xf]
      %v377 = vld [vmem:[%s216 + $0x38] sm:$0xf]
      %v378 = vld [vmem:[%s216 + $0x3c] sm:$0xf]
      %v379 = vld [vmem:[%s216 + $0x40] sm:$0xf]
      %v380 = vld [vmem:[%s216 + $0x44] sm:$0xf]
      %v381 = vld [vmem:[%s216 + $0x48] sm:$0xf]
      %v382 = vld [vmem:[%s216 + $0x4c] sm:$0xf]
      %v383 = vld [vmem:[%s216 + $0x50] sm:$0xf]
      %v384 = vld [vmem:[%s216 + $0x54] sm:$0xf]
      %v385 = vld [vmem:[%s216 + $0x58] sm:$0xf]
      %v386 = vld [vmem:[%s216 + $0x5c] sm:$0xf]
      %v387 = vld [vmem:[%s216 + $0x60] sm:$0xf]
      %v388 = vld [vmem:[%s216 + $0x64] sm:$0xf]
      %v389 = vld [vmem:[%s216 + $0x68] sm:$0xf]
      %v390 = vld [vmem:[%s216 + $0x6c] sm:$0xf]
      %v391 = vld [vmem:[%s216 + $0x70] sm:$0xf]
      %v392 = vld [vmem:[%s216 + $0x74] sm:$0xf]
      %v393 = vld [vmem:[%s216 + $0x78] sm:$0xf]
      %v394 = vld [vmem:[%s216 + $0x7c] sm:$0xf]
      %v427 = vunpack.c.l.b16 %v331
      %v428 = vunpack.c.l.b16 %v332
      %v429 = vunpack.c.l.b16 %v333
      %v430 = vunpack.c.l.b16 %v334
      %v431 = vunpack.c.l.b16 %v335
      %v432 = vunpack.c.l.b16 %v336
      %v433 = vunpack.c.l.b16 %v337
      %v434 = vunpack.c.l.b16 %v338
      %v435 = vunpack.c.l.b16 %v339
      %v436 = vunpack.c.l.b16 %v340
      %v437 = vunpack.c.l.b16 %v341
      %v438 = vunpack.c.l.b16 %v342
      %v439 = vunpack.c.l.b16 %v343
      %v440 = vunpack.c.l.b16 %v344
      %v441 = vunpack.c.l.b16 %v345
      %v442 = vunpack.c.l.b16 %v346
      %v443 = vunpack.c.l.b16 %v347
      %v444 = vunpack.c.l.b16 %v348
      %v445 = vunpack.c.l.b16 %v349
      %v446 = vunpack.c.l.b16 %v350
      %v447 = vunpack.c.l.b16 %v351
      %v448 = vunpack.c.l.b16 %v352
      %v449 = vunpack.c.l.b16 %v353
      %v450 = vunpack.c.l.b16 %v354
      %v451 = vunpack.c.l.b16 %v355
      %v452 = vunpack.c.l.b16 %v356
      %v453 = vunpack.c.l.b16 %v357
      %v454 = vunpack.c.l.b16 %v358
      %v455 = vunpack.c.l.b16 %v359
      %v456 = vunpack.c.l.b16 %v360
      %v457 = vunpack.c.l.b16 %v361
      %v458 = vunpack.c.l.b16 %v362
      %v459 = vpack.c.b16 %v428, %v427
      %v460 = vpack.c.b16 %v430, %v429
      %v461 = vpack.c.b16 %v432, %v431
      %v462 = vpack.c.b16 %v434, %v433
      %v463 = vpack.c.b16 %v436, %v435
      %v464 = vpack.c.b16 %v438, %v437
      %v465 = vpack.c.b16 %v440, %v439
      %v466 = vpack.c.b16 %v442, %v441
      %v467 = vpack.c.b16 %v444, %v443
      %v468 = vpack.c.b16 %v446, %v445
      %v469 = vpack.c.b16 %v448, %v447
      %v470 = vpack.c.b16 %v450, %v449
      %v471 = vpack.c.b16 %v452, %v451
      %v472 = vpack.c.b16 %v454, %v453
      %v473 = vpack.c.b16 %v456, %v455
      %v474 = vpack.c.b16 %v458, %v457
      %v523 = vunpack.c.l.b16 %v363
      %v524 = vunpack.c.l.b16 %v364
      %v525 = vunpack.c.l.b16 %v365
      %v526 = vunpack.c.l.b16 %v366
      %v527 = vunpack.c.l.b16 %v367
      %v528 = vunpack.c.l.b16 %v368
      %v529 = vunpack.c.l.b16 %v369
      %v530 = vunpack.c.l.b16 %v370
      %v531 = vunpack.c.l.b16 %v371
      %v532 = vunpack.c.l.b16 %v372
      %v533 = vunpack.c.l.b16 %v373
      %v534 = vunpack.c.l.b16 %v374
      %v535 = vunpack.c.l.b16 %v375
      %v536 = vunpack.c.l.b16 %v376
      %v537 = vunpack.c.l.b16 %v377
      %v538 = vunpack.c.l.b16 %v378
      %v539 = vunpack.c.l.b16 %v379
      %v540 = vunpack.c.l.b16 %v380
      %v541 = vunpack.c.l.b16 %v381
      %v542 = vunpack.c.l.b16 %v382
      %v543 = vunpack.c.l.b16 %v383
      %v544 = vunpack.c.l.b16 %v384
      %v545 = vunpack.c.l.b16 %v385
      %v546 = vunpack.c.l.b16 %v386
      %v547 = vunpack.c.l.b16 %v387
      %v548 = vunpack.c.l.b16 %v388
      %v549 = vunpack.c.l.b16 %v389
      %v550 = vunpack.c.l.b16 %v390
      %v551 = vunpack.c.l.b16 %v391
      %v552 = vunpack.c.l.b16 %v392
      %v553 = vunpack.c.l.b16 %v393
      %v554 = vunpack.c.l.b16 %v394
      %v555 = vpack.c.b16 %v524, %v523
      %v556 = vpack.c.b16 %v526, %v525
      %v557 = vpack.c.b16 %v528, %v527
      %v558 = vpack.c.b16 %v530, %v529
      %v559 = vpack.c.b16 %v532, %v531
      %v560 = vpack.c.b16 %v534, %v533
      %v561 = vpack.c.b16 %v536, %v535
      %v562 = vpack.c.b16 %v538, %v537
      %v563 = vpack.c.b16 %v540, %v539
      %v564 = vpack.c.b16 %v542, %v541
      %v565 = vpack.c.b16 %v544, %v543
      %v566 = vpack.c.b16 %v546, %v545
      %v567 = vpack.c.b16 %v548, %v547
      %v568 = vpack.c.b16 %v550, %v549
      %v569 = vpack.c.b16 %v552, %v551
      %v570 = vpack.c.b16 %v554, %v553
      %587 = vmatpush.bf16.xpose.msra.mxu0 %v562
      %588 = vmatpush.bf16.xpose.msra.mxu0 %v561
      %589 = vmatpush.bf16.xpose.msra.mxu0 %v560
      %590 = vmatpush.bf16.xpose.msra.mxu0 %v559
      %591 = vmatpush.bf16.xpose.msra.mxu0 %v558
      %592 = vmatpush.bf16.xpose.msra.mxu0 %v557
      %593 = vmatpush.bf16.xpose.msra.mxu0 %v556
      %594 = vmatpush.bf16.xpose.msra.mxu0 %v555
      %595 = vmatmul.bf16.gmra.mxu0 %v459
      %v596 = vpop.f32.mrf.mxu0
      %v597 = vadd.f32 0.0, %v596
      %v598 = vpop.f32.mrf.mxu0
      %v599 = vadd.f32 0.0, %v598
      %600 = vmatmul.bf16.gmra.mxu0 %v460
      %v601 = vpop.f32.mrf.mxu0
      %v602 = vadd.f32 0.0, %v601
      %v603 = vpop.f32.mrf.mxu0
      %v604 = vadd.f32 0.0, %v603
      %605 = vmatmul.bf16.gmra.mxu0 %v461
      %v606 = vpop.f32.mrf.mxu0
      %v607 = vadd.f32 0.0, %v606
      %v608 = vpop.f32.mrf.mxu0
      %v609 = vadd.f32 0.0, %v608
      %610 = vmatmul.bf16.gmra.mxu0 %v462
      %v611 = vpop.f32.mrf.mxu0
      %v612 = vadd.f32 0.0, %v611
      %v613 = vpop.f32.mrf.mxu0
      %v614 = vadd.f32 0.0, %v613
      %615 = vmatmul.bf16.gmra.mxu0 %v463
      %v616 = vpop.f32.mrf.mxu0
      %v617 = vadd.f32 0.0, %v616
      %v618 = vpop.f32.mrf.mxu0
      %v619 = vadd.f32 0.0, %v618
      %620 = vmatmul.bf16.gmra.mxu0 %v464
      %v621 = vpop.f32.mrf.mxu0
      %v622 = vadd.f32 0.0, %v621
      %v623 = vpop.f32.mrf.mxu0
      %v624 = vadd.f32 0.0, %v623
      %625 = vmatmul.bf16.gmra.mxu0 %v465
      %v626 = vpop.f32.mrf.mxu0
      %v627 = vadd.f32 0.0, %v626
      %v628 = vpop.f32.mrf.mxu0
      %v629 = vadd.f32 0.0, %v628
      %630 = vmatmul.bf16.gmra.mxu0 %v466
      %v631 = vpop.f32.mrf.mxu0
      %v632 = vadd.f32 0.0, %v631
      %v633 = vpop.f32.mrf.mxu0
      %v634 = vadd.f32 0.0, %v633
      %635 = vmatmul.bf16.gmra.mxu0 %v467
      %v636 = vpop.f32.mrf.mxu0
      %v637 = vadd.f32 0.0, %v636
      %v638 = vpop.f32.mrf.mxu0
      %v639 = vadd.f32 0.0, %v638
      %640 = vmatmul.bf16.gmra.mxu0 %v468
      %v641 = vpop.f32.mrf.mxu0
      %v642 = vadd.f32 0.0, %v641
      %v643 = vpop.f32.mrf.mxu0
      %v644 = vadd.f32 0.0, %v643
      %645 = vmatmul.bf16.gmra.mxu0 %v469
      %v646 = vpop.f32.mrf.mxu0
      %v647 = vadd.f32 0.0, %v646
      %v648 = vpop.f32.mrf.mxu0
      %v649 = vadd.f32 0.0, %v648
      %650 = vmatmul.bf16.gmra.mxu0 %v470
      %v651 = vpop.f32.mrf.mxu0
      %v652 = vadd.f32 0.0, %v651
      %v653 = vpop.f32.mrf.mxu0
      %v654 = vadd.f32 0.0, %v653
      %655 = vmatmul.bf16.gmra.mxu0 %v471
      %v656 = vpop.f32.mrf.mxu0
      %v657 = vadd.f32 0.0, %v656
      %v658 = vpop.f32.mrf.mxu0
      %v659 = vadd.f32 0.0, %v658
      %660 = vmatmul.bf16.gmra.mxu0 %v472
      %v661 = vpop.f32.mrf.mxu0
      %v662 = vadd.f32 0.0, %v661
      %v663 = vpop.f32.mrf.mxu0
      %v664 = vadd.f32 0.0, %v663
      %665 = vmatmul.bf16.gmra.mxu0 %v473
      %v666 = vpop.f32.mrf.mxu0
      %v667 = vadd.f32 0.0, %v666
      %v668 = vpop.f32.mrf.mxu0
      %v669 = vadd.f32 0.0, %v668
      %670 = vmatmul.bf16.gmra.mxu0 %v474
      %v671 = vpop.f32.mrf.mxu0
      %v672 = vadd.f32 0.0, %v671
      %v673 = vpop.f32.mrf.mxu0
      %v674 = vadd.f32 0.0, %v673
      %675 = vdwg.mxu0
      %676 = vmatpush.bf16.xpose.msra.mxu0 %v570
      %677 = vmatpush.bf16.xpose.msra.mxu0 %v569
      %678 = vmatpush.bf16.xpose.msra.mxu0 %v568
      %679 = vmatpush.bf16.xpose.msra.mxu0 %v567
      %680 = vmatpush.bf16.xpose.msra.mxu0 %v566
      %681 = vmatpush.bf16.xpose.msra.mxu0 %v565
      %682 = vmatpush.bf16.xpose.msra.mxu0 %v564
      %683 = vmatpush.bf16.xpose.msra.mxu0 %v563
      %684 = vmatmul.bf16.gmra.mxu0 %v459
      %v685 = vpop.f32.mrf.mxu0
      %v686 = vadd.f32 0.0, %v685
      %v687 = vpop.f32.mrf.mxu0
      %v688 = vadd.f32 0.0, %v687
      %689 = vmatmul.bf16.gmra.mxu0 %v460
      %v690 = vpop.f32.mrf.mxu0
      %v691 = vadd.f32 0.0, %v690
      %v692 = vpop.f32.mrf.mxu0
      %v693 = vadd.f32 0.0, %v692
      %694 = vmatmul.bf16.gmra.mxu0 %v461
      %v695 = vpop.f32.mrf.mxu0
      %v696 = vadd.f32 0.0, %v695
      %v697 = vpop.f32.mrf.mxu0
      %v698 = vadd.f32 0.0, %v697
      %699 = vmatmul.bf16.gmra.mxu0 %v462
      %v700 = vpop.f32.mrf.mxu0
      %v701 = vadd.f32 0.0, %v700
      %v702 = vpop.f32.mrf.mxu0
      %v703 = vadd.f32 0.0, %v702
      %704 = vmatmul.bf16.gmra.mxu0 %v463
      %v705 = vpop.f32.mrf.mxu0
      %v706 = vadd.f32 0.0, %v705
      %v707 = vpop.f32.mrf.mxu0
      %v708 = vadd.f32 0.0, %v707
      %709 = vmatmul.bf16.gmra.mxu0 %v464
      %v710 = vpop.f32.mrf.mxu0
      %v711 = vadd.f32 0.0, %v710
      %v712 = vpop.f32.mrf.mxu0
      %v713 = vadd.f32 0.0, %v712
      %714 = vmatmul.bf16.gmra.mxu0 %v465
      %v715 = vpop.f32.mrf.mxu0
      %v716 = vadd.f32 0.0, %v715
      %v717 = vpop.f32.mrf.mxu0
      %v718 = vadd.f32 0.0, %v717
      %719 = vmatmul.bf16.gmra.mxu0 %v466
      %v720 = vpop.f32.mrf.mxu0
      %v721 = vadd.f32 0.0, %v720
      %v722 = vpop.f32.mrf.mxu0
      %v723 = vadd.f32 0.0, %v722
      %724 = vmatmul.bf16.gmra.mxu0 %v467
      %v725 = vpop.f32.mrf.mxu0
      %v726 = vadd.f32 0.0, %v725
      %v727 = vpop.f32.mrf.mxu0
      %v728 = vadd.f32 0.0, %v727
      %729 = vmatmul.bf16.gmra.mxu0 %v468
      %v730 = vpop.f32.mrf.mxu0
      %v731 = vadd.f32 0.0, %v730
      %v732 = vpop.f32.mrf.mxu0
      %v733 = vadd.f32 0.0, %v732
      %734 = vmatmul.bf16.gmra.mxu0 %v469
      %v735 = vpop.f32.mrf.mxu0
      %v736 = vadd.f32 0.0, %v735
      %v737 = vpop.f32.mrf.mxu0
      %v738 = vadd.f32 0.0, %v737
      %739 = vmatmul.bf16.gmra.mxu0 %v470
      %v740 = vpop.f32.mrf.mxu0
      %v741 = vadd.f32 0.0, %v740
      %v742 = vpop.f32.mrf.mxu0
      %v743 = vadd.f32 0.0, %v742
      %744 = vmatmul.bf16.gmra.mxu0 %v471
      %v745 = vpop.f32.mrf.mxu0
      %v746 = vadd.f32 0.0, %v745
      %v747 = vpop.f32.mrf.mxu0
      %v748 = vadd.f32 0.0, %v747
      %749 = vmatmul.bf16.gmra.mxu0 %v472
      %v750 = vpop.f32.mrf.mxu0
      %v751 = vadd.f32 0.0, %v750
      %v752 = vpop.f32.mrf.mxu0
      %v753 = vadd.f32 0.0, %v752
      %754 = vmatmul.bf16.gmra.mxu0 %v473
      %v755 = vpop.f32.mrf.mxu0
      %v756 = vadd.f32 0.0, %v755
      %v757 = vpop.f32.mrf.mxu0
      %v758 = vadd.f32 0.0, %v757
      %759 = vmatmul.bf16.gmra.mxu0 %v474
      %v760 = vpop.f32.mrf.mxu0
      %v761 = vadd.f32 0.0, %v760
      %v762 = vpop.f32.mrf.mxu0
      %v763 = vadd.f32 0.0, %v762
      %764 = vdwg.mxu0
      %v765 = vld [vmem:[%s222] sm:$0xff]
      %v766 = vld [vmem:[%s222 + $0x8] sm:$0xff]
      %v767 = vld [vmem:[%s222 + $0x10] sm:$0xff]
      %v768 = vld [vmem:[%s222 + $0x18] sm:$0xff]
      %v769 = vld [vmem:[%s222 + $0x20] sm:$0xff]
      %v770 = vld [vmem:[%s222 + $0x28] sm:$0xff]
      %v771 = vld [vmem:[%s222 + $0x30] sm:$0xff]
      %v772 = vld [vmem:[%s222 + $0x38] sm:$0xff]
      %v773 = vld [vmem:[%s222 + $0x40] sm:$0xff]
      %v774 = vld [vmem:[%s222 + $0x48] sm:$0xff]
      %v775 = vld [vmem:[%s222 + $0x50] sm:$0xff]
      %v776 = vld [vmem:[%s222 + $0x58] sm:$0xff]
      %v777 = vld [vmem:[%s222 + $0x60] sm:$0xff]
      %v778 = vld [vmem:[%s222 + $0x68] sm:$0xff]
      %v779 = vld [vmem:[%s222 + $0x70] sm:$0xff]
      %v780 = vld [vmem:[%s222 + $0x78] sm:$0xff]
      %v781 = vld [vmem:[%s222 + $0x80] sm:$0xff]
      %v782 = vld [vmem:[%s222 + $0x88] sm:$0xff]
      %v783 = vld [vmem:[%s222 + $0x90] sm:$0xff]
      %v784 = vld [vmem:[%s222 + $0x98] sm:$0xff]
      %v785 = vld [vmem:[%s222 + $0xa0] sm:$0xff]
      %v786 = vld [vmem:[%s222 + $0xa8] sm:$0xff]
      %v787 = vld [vmem:[%s222 + $0xb0] sm:$0xff]
      %v788 = vld [vmem:[%s222 + $0xb8] sm:$0xff]
      %v789 = vld [vmem:[%s222 + $0xc0] sm:$0xff]
      %v790 = vld [vmem:[%s222 + $0xc8] sm:$0xff]
      %v791 = vld [vmem:[%s222 + $0xd0] sm:$0xff]
      %v792 = vld [vmem:[%s222 + $0xd8] sm:$0xff]
      %v793 = vld [vmem:[%s222 + $0xe0] sm:$0xff]
      %v794 = vld [vmem:[%s222 + $0xe8] sm:$0xff]
      %v795 = vld [vmem:[%s222 + $0xf0] sm:$0xff]
      %v796 = vld [vmem:[%s222 + $0xf8] sm:$0xff]
      %v797 = vlaneseq
      %v798 = vand.u32 %v797, 127
      %v799 = vadd.s32 %v798, 128
      %s800 = smul.u32 %s19, 256
      %v801 = vstv %s800
      %v802 = vadd.s32 %v798, %v801
      %v803 = vadd.s32 %v799, %v801
      %v804 = vld [vmem:[#allocation4] sm:$0xff]
      %v805 = vld [vmem:[#allocation4 + $0x8] sm:$0xff]
      %v806 = vld [vmem:[#allocation4 + $0x10] sm:$0xff]
      %v807 = vld [vmem:[#allocation4 + $0x18] sm:$0xff]
      %v808 = vld [vmem:[#allocation4 + $0x20] sm:$0xff]
      %v809 = vld [vmem:[#allocation4 + $0x28] sm:$0xff]
      %v810 = vld [vmem:[#allocation4 + $0x30] sm:$0xff]
      %v811 = vld [vmem:[#allocation4 + $0x38] sm:$0xff]
      %v812 = vld [vmem:[#allocation4 + $0x40] sm:$0xff]
      %v813 = vld [vmem:[#allocation4 + $0x48] sm:$0xff]
      %v814 = vld [vmem:[#allocation4 + $0x50] sm:$0xff]
      %v815 = vld [vmem:[#allocation4 + $0x58] sm:$0xff]
      %v816 = vld [vmem:[#allocation4 + $0x60] sm:$0xff]
      %v817 = vld [vmem:[#allocation4 + $0x68] sm:$0xff]
      %v818 = vld [vmem:[#allocation4 + $0x70] sm:$0xff]
      %v819 = vld [vmem:[#allocation4 + $0x78] sm:$0xff]
      %v820 = vld [vmem:[#allocation4 + $0x80] sm:$0xff]
      %v821 = vld [vmem:[#allocation4 + $0x88] sm:$0xff]
      %v822 = vld [vmem:[#allocation4 + $0x90] sm:$0xff]
      %v823 = vld [vmem:[#allocation4 + $0x98] sm:$0xff]
      %v824 = vld [vmem:[#allocation4 + $0xa0] sm:$0xff]
      %v825 = vld [vmem:[#allocation4 + $0xa8] sm:$0xff]
      %v826 = vld [vmem:[#allocation4 + $0xb0] sm:$0xff]
      %v827 = vld [vmem:[#allocation4 + $0xb8] sm:$0xff]
      %v828 = vld [vmem:[#allocation4 + $0xc0] sm:$0xff]
      %v829 = vld [vmem:[#allocation4 + $0xc8] sm:$0xff]
      %v830 = vld [vmem:[#allocation4 + $0xd0] sm:$0xff]
      %v831 = vld [vmem:[#allocation4 + $0xd8] sm:$0xff]
      %v832 = vld [vmem:[#allocation4 + $0xe0] sm:$0xff]
      %v833 = vld [vmem:[#allocation4 + $0xe8] sm:$0xff]
      %v834 = vld [vmem:[#allocation4 + $0xf0] sm:$0xff]
      %v835 = vld [vmem:[#allocation4 + $0xf8] sm:$0xff]
      %836 = vset.pattern.permute.xlu0 0
      %837 = vperm.xlu0 %836, %v765
      %v838 = vpop.permute.xlu0 %837
      %839 = vset.pattern.permute.xlu0 0
      %840 = vperm.xlu0 %839, %v766
      %v841 = vpop.permute.xlu0 %840
      %842 = vset.pattern.permute.xlu0 0
      %843 = vperm.xlu0 %842, %v767
      %v844 = vpop.permute.xlu0 %843
      %845 = vset.pattern.permute.xlu0 0
      %846 = vperm.xlu0 %845, %v768
      %v847 = vpop.permute.xlu0 %846
      %848 = vset.pattern.permute.xlu0 0
      %849 = vperm.xlu0 %848, %v769
      %v850 = vpop.permute.xlu0 %849
      %851 = vset.pattern.permute.xlu0 0
      %852 = vperm.xlu0 %851, %v770
      %v853 = vpop.permute.xlu0 %852
      %854 = vset.pattern.permute.xlu0 0
      %855 = vperm.xlu0 %854, %v771
      %v856 = vpop.permute.xlu0 %855
      %857 = vset.pattern.permute.xlu0 0
      %858 = vperm.xlu0 %857, %v772
      %v859 = vpop.permute.xlu0 %858
      %860 = vset.pattern.permute.xlu0 0
      %861 = vperm.xlu0 %860, %v773
      %v862 = vpop.permute.xlu0 %861
      %863 = vset.pattern.permute.xlu0 0
      %864 = vperm.xlu0 %863, %v774
      %v865 = vpop.permute.xlu0 %864
      %866 = vset.pattern.permute.xlu0 0
      %867 = vperm.xlu0 %866, %v775
      %v868 = vpop.permute.xlu0 %867
      %869 = vset.pattern.permute.xlu0 0
      %870 = vperm.xlu0 %869, %v776
      %v871 = vpop.permute.xlu0 %870
      %872 = vset.pattern.permute.xlu0 0
      %873 = vperm.xlu0 %872, %v777
      %v874 = vpop.permute.xlu0 %873
      %875 = vset.pattern.permute.xlu0 0
      %876 = vperm.xlu0 %875, %v778
      %v877 = vpop.permute.xlu0 %876
      %878 = vset.pattern.permute.xlu0 0
      %879 = vperm.xlu0 %878, %v779
      %v880 = vpop.permute.xlu0 %879
      %881 = vset.pattern.permute.xlu0 0
      %882 = vperm.xlu0 %881, %v780
      %v883 = vpop.permute.xlu0 %882
      %884 = vset.pattern.permute.xlu0 0
      %885 = vperm.xlu0 %884, %v781
      %v886 = vpop.permute.xlu0 %885
      %887 = vset.pattern.permute.xlu0 0
      %888 = vperm.xlu0 %887, %v782
      %v889 = vpop.permute.xlu0 %888
      %890 = vset.pattern.permute.xlu0 0
      %891 = vperm.xlu0 %890, %v783
      %v892 = vpop.permute.xlu0 %891
      %893 = vset.pattern.permute.xlu0 0
      %894 = vperm.xlu0 %893, %v784
      %v895 = vpop.permute.xlu0 %894
      %896 = vset.pattern.permute.xlu0 0
      %897 = vperm.xlu0 %896, %v785
      %v898 = vpop.permute.xlu0 %897
      %899 = vset.pattern.permute.xlu0 0
      %900 = vperm.xlu0 %899, %v786
      %v901 = vpop.permute.xlu0 %900
      %902 = vset.pattern.permute.xlu0 0
      %903 = vperm.xlu0 %902, %v787
      %v904 = vpop.permute.xlu0 %903
      %905 = vset.pattern.permute.xlu0 0
      %906 = vperm.xlu0 %905, %v788
      %v907 = vpop.permute.xlu0 %906
      %908 = vset.pattern.permute.xlu0 0
      %909 = vperm.xlu0 %908, %v789
      %v910 = vpop.permute.xlu0 %909
      %911 = vset.pattern.permute.xlu0 0
      %912 = vperm.xlu0 %911, %v790
      %v913 = vpop.permute.xlu0 %912
      %914 = vset.pattern.permute.xlu0 0
      %915 = vperm.xlu0 %914, %v791
      %v916 = vpop.permute.xlu0 %915
      %917 = vset.pattern.permute.xlu0 0
      %918 = vperm.xlu0 %917, %v792
      %v919 = vpop.permute.xlu0 %918
      %920 = vset.pattern.permute.xlu0 0
      %921 = vperm.xlu0 %920, %v793
      %v922 = vpop.permute.xlu0 %921
      %923 = vset.pattern.permute.xlu0 0
      %924 = vperm.xlu0 %923, %v794
      %v925 = vpop.permute.xlu0 %924
      %926 = vset.pattern.permute.xlu0 0
      %927 = vperm.xlu0 %926, %v795
      %v928 = vpop.permute.xlu0 %927
      %929 = vset.pattern.permute.xlu0 0
      %930 = vperm.xlu0 %929, %v796
      %v931 = vpop.permute.xlu0 %930
      %vm932 = vcmp.eq.s32.totalorder %v802, %v838
      %vm933 = vcmp.eq.s32.totalorder %v803, %v838
      %vm934 = vcmp.eq.s32.totalorder %v802, %v841
      %vm935 = vcmp.eq.s32.totalorder %v803, %v841
      %vm936 = vcmp.eq.s32.totalorder %v802, %v844
      %vm937 = vcmp.eq.s32.totalorder %v803, %v844
      %vm938 = vcmp.eq.s32.totalorder %v802, %v847
      %vm939 = vcmp.eq.s32.totalorder %v803, %v847
      %vm940 = vcmp.eq.s32.totalorder %v802, %v850
      %vm941 = vcmp.eq.s32.totalorder %v803, %v850
      %vm942 = vcmp.eq.s32.totalorder %v802, %v853
      %vm943 = vcmp.eq.s32.totalorder %v803, %v853
      %vm944 = vcmp.eq.s32.totalorder %v802, %v856
      %vm945 = vcmp.eq.s32.totalorder %v803, %v856
      %vm946 = vcmp.eq.s32.totalorder %v802, %v859
      %vm947 = vcmp.eq.s32.totalorder %v803, %v859
      %vm948 = vcmp.eq.s32.totalorder %v802, %v862
      %vm949 = vcmp.eq.s32.totalorder %v803, %v862
      %vm950 = vcmp.eq.s32.totalorder %v802, %v865
      %vm951 = vcmp.eq.s32.totalorder %v803, %v865
      %vm952 = vcmp.eq.s32.totalorder %v802, %v868
      %vm953 = vcmp.eq.s32.totalorder %v803, %v868
      %vm954 = vcmp.eq.s32.totalorder %v802, %v871
      %vm955 = vcmp.eq.s32.totalorder %v803, %v871
      %vm956 = vcmp.eq.s32.totalorder %v802, %v874
      %vm957 = vcmp.eq.s32.totalorder %v803, %v874
      %vm958 = vcmp.eq.s32.totalorder %v802, %v877
      %vm959 = vcmp.eq.s32.totalorder %v803, %v877
      %vm960 = vcmp.eq.s32.totalorder %v802, %v880
      %vm961 = vcmp.eq.s32.totalorder %v803, %v880
      %vm962 = vcmp.eq.s32.totalorder %v802, %v883
      %vm963 = vcmp.eq.s32.totalorder %v803, %v883
      %vm964 = vcmp.eq.s32.totalorder %v802, %v886
      %vm965 = vcmp.eq.s32.totalorder %v803, %v886
      %vm966 = vcmp.eq.s32.totalorder %v802, %v889
      %vm967 = vcmp.eq.s32.totalorder %v803, %v889
      %vm968 = vcmp.eq.s32.totalorder %v802, %v892
      %vm969 = vcmp.eq.s32.totalorder %v803, %v892
      %vm970 = vcmp.eq.s32.totalorder %v802, %v895
      %vm971 = vcmp.eq.s32.totalorder %v803, %v895
      %vm972 = vcmp.eq.s32.totalorder %v802, %v898
      %vm973 = vcmp.eq.s32.totalorder %v803, %v898
      %vm974 = vcmp.eq.s32.totalorder %v802, %v901
      %vm975 = vcmp.eq.s32.totalorder %v803, %v901
      %vm976 = vcmp.eq.s32.totalorder %v802, %v904
      %vm977 = vcmp.eq.s32.totalorder %v803, %v904
      %vm978 = vcmp.eq.s32.totalorder %v802, %v907
      %vm979 = vcmp.eq.s32.totalorder %v803, %v907
      %vm980 = vcmp.eq.s32.totalorder %v802, %v910
      %vm981 = vcmp.eq.s32.totalorder %v803, %v910
      %vm982 = vcmp.eq.s32.totalorder %v802, %v913
      %vm983 = vcmp.eq.s32.totalorder %v803, %v913
      %vm984 = vcmp.eq.s32.totalorder %v802, %v916
      %vm985 = vcmp.eq.s32.totalorder %v803, %v916
      %vm986 = vcmp.eq.s32.totalorder %v802, %v919
      %vm987 = vcmp.eq.s32.totalorder %v803, %v919
      %vm988 = vcmp.eq.s32.totalorder %v802, %v922
      %vm989 = vcmp.eq.s32.totalorder %v803, %v922
      %vm990 = vcmp.eq.s32.totalorder %v802, %v925
      %vm991 = vcmp.eq.s32.totalorder %v803, %v925
      %vm992 = vcmp.eq.s32.totalorder %v802, %v928
      %vm993 = vcmp.eq.s32.totalorder %v803, %v928
      %vm994 = vcmp.eq.s32.totalorder %v802, %v931
      %vm995 = vcmp.eq.s32.totalorder %v803, %v931
      %v996 = vsel %vm932, %v597, 0.0
      %v997 = vsel %vm933, %v686, 0.0
      %v998 = vsel %vm934, %v599, 0.0
      %v999 = vsel %vm935, %v688, 0.0
      %v1000 = vsel %vm936, %v602, 0.0
      %v1001 = vsel %vm937, %v691, 0.0
      %v1002 = vsel %vm938, %v604, 0.0
      %v1003 = vsel %vm939, %v693, 0.0
      %v1004 = vsel %vm940, %v607, 0.0
      %v1005 = vsel %vm941, %v696, 0.0
      %v1006 = vsel %vm942, %v609, 0.0
      %v1007 = vsel %vm943, %v698, 0.0
      %v1008 = vsel %vm944, %v612, 0.0
      %v1009 = vsel %vm945, %v701, 0.0
      %v1010 = vsel %vm946, %v614, 0.0
      %v1011 = vsel %vm947, %v703, 0.0
      %v1012 = vsel %vm948, %v617, 0.0
      %v1013 = vsel %vm949, %v706, 0.0
      %v1014 = vsel %vm950, %v619, 0.0
      %v1015 = vsel %vm951, %v708, 0.0
      %v1016 = vsel %vm952, %v622, 0.0
      %v1017 = vsel %vm953, %v711, 0.0
      %v1018 = vsel %vm954, %v624, 0.0
      %v1019 = vsel %vm955, %v713, 0.0
      %v1020 = vsel %vm956, %v627, 0.0
      %v1021 = vsel %vm957, %v716, 0.0
      %v1022 = vsel %vm958, %v629, 0.0
      %v1023 = vsel %vm959, %v718, 0.0
      %v1024 = vsel %vm960, %v632, 0.0
      %v1025 = vsel %vm961, %v721, 0.0
      %v1026 = vsel %vm962, %v634, 0.0
      %v1027 = vsel %vm963, %v723, 0.0
      %v1028 = vsel %vm964, %v637, 0.0
      %v1029 = vsel %vm965, %v726, 0.0
      %v1030 = vsel %vm966, %v639, 0.0
      %v1031 = vsel %vm967, %v728, 0.0
      %v1032 = vsel %vm968, %v642, 0.0
      %v1033 = vsel %vm969, %v731, 0.0
      %v1034 = vsel %vm970, %v644, 0.0
      %v1035 = vsel %vm971, %v733, 0.0
      %v1036 = vsel %vm972, %v647, 0.0
      %v1037 = vsel %vm973, %v736, 0.0
      %v1038 = vsel %vm974, %v649, 0.0
      %v1039 = vsel %vm975, %v738, 0.0
      %v1040 = vsel %vm976, %v652, 0.0
      %v1041 = vsel %vm977, %v741, 0.0
      %v1042 = vsel %vm978, %v654, 0.0
      %v1043 = vsel %vm979, %v743, 0.0
      %v1044 = vsel %vm980, %v657, 0.0
      %v1045 = vsel %vm981, %v746, 0.0
      %v1046 = vsel %vm982, %v659, 0.0
      %v1047 = vsel %vm983, %v748, 0.0
      %v1048 = vsel %vm984, %v662, 0.0
      %v1049 = vsel %vm985, %v751, 0.0
      %v1050 = vsel %vm986, %v664, 0.0
      %v1051 = vsel %vm987, %v753, 0.0
      %v1052 = vsel %vm988, %v667, 0.0
      %v1053 = vsel %vm989, %v756, 0.0
      %v1054 = vsel %vm990, %v669, 0.0
      %v1055 = vsel %vm991, %v758, 0.0
      %v1056 = vsel %vm992, %v672, 0.0
      %v1057 = vsel %vm993, %v761, 0.0
      %v1058 = vsel %vm994, %v674, 0.0
      %v1059 = vsel %vm995, %v763, 0.0
      %v1060 = vadd.f32 %v996, %v997
      %1061 = vadd.xlane.f32.xlu0 %v1060
      %v1062 = vpop.xlane.xlu0 %1061
      %v1063 = vadd.f32 %v998, %v999
      %1064 = vadd.xlane.f32.xlu0 %v1063
      %v1065 = vpop.xlane.xlu0 %1064
      %v1066 = vadd.f32 %v1000, %v1001
      %1067 = vadd.xlane.f32.xlu0 %v1066
      %v1068 = vpop.xlane.xlu0 %1067
      %v1069 = vadd.f32 %v1002, %v1003
      %1070 = vadd.xlane.f32.xlu0 %v1069
      %v1071 = vpop.xlane.xlu0 %1070
      %v1072 = vadd.f32 %v1004, %v1005
      %1073 = vadd.xlane.f32.xlu0 %v1072
      %v1074 = vpop.xlane.xlu0 %1073
      %v1075 = vadd.f32 %v1006, %v1007
      %1076 = vadd.xlane.f32.xlu0 %v1075
      %v1077 = vpop.xlane.xlu0 %1076
      %v1078 = vadd.f32 %v1008, %v1009
      %1079 = vadd.xlane.f32.xlu0 %v1078
      %v1080 = vpop.xlane.xlu0 %1079
      %v1081 = vadd.f32 %v1010, %v1011
      %1082 = vadd.xlane.f32.xlu0 %v1081
      %v1083 = vpop.xlane.xlu0 %1082
      %v1084 = vadd.f32 %v1012, %v1013
      %1085 = vadd.xlane.f32.xlu0 %v1084
      %v1086 = vpop.xlane.xlu0 %1085
      %v1087 = vadd.f32 %v1014, %v1015
      %1088 = vadd.xlane.f32.xlu0 %v1087
      %v1089 = vpop.xlane.xlu0 %1088
      %v1090 = vadd.f32 %v1016, %v1017
      %1091 = vadd.xlane.f32.xlu0 %v1090
      %v1092 = vpop.xlane.xlu0 %1091
      %v1093 = vadd.f32 %v1018, %v1019
      %1094 = vadd.xlane.f32.xlu0 %v1093
      %v1095 = vpop.xlane.xlu0 %1094
      %v1096 = vadd.f32 %v1020, %v1021
      %1097 = vadd.xlane.f32.xlu0 %v1096
      %v1098 = vpop.xlane.xlu0 %1097
      %v1099 = vadd.f32 %v1022, %v1023
      %1100 = vadd.xlane.f32.xlu0 %v1099
      %v1101 = vpop.xlane.xlu0 %1100
      %v1102 = vadd.f32 %v1024, %v1025
      %1103 = vadd.xlane.f32.xlu0 %v1102
      %v1104 = vpop.xlane.xlu0 %1103
      %v1105 = vadd.f32 %v1026, %v1027
      %1106 = vadd.xlane.f32.xlu0 %v1105
      %v1107 = vpop.xlane.xlu0 %1106
      %v1108 = vadd.f32 %v1028, %v1029
      %1109 = vadd.xlane.f32.xlu0 %v1108
      %v1110 = vpop.xlane.xlu0 %1109
      %v1111 = vadd.f32 %v1030, %v1031
      %1112 = vadd.xlane.f32.xlu0 %v1111
      %v1113 = vpop.xlane.xlu0 %1112
      %v1114 = vadd.f32 %v1032, %v1033
      %1115 = vadd.xlane.f32.xlu0 %v1114
      %v1116 = vpop.xlane.xlu0 %1115
      %v1117 = vadd.f32 %v1034, %v1035
      %1118 = vadd.xlane.f32.xlu0 %v1117
      %v1119 = vpop.xlane.xlu0 %1118
      %v1120 = vadd.f32 %v1036, %v1037
      %1121 = vadd.xlane.f32.xlu0 %v1120
      %v1122 = vpop.xlane.xlu0 %1121
      %v1123 = vadd.f32 %v1038, %v1039
      %1124 = vadd.xlane.f32.xlu0 %v1123
      %v1125 = vpop.xlane.xlu0 %1124
      %v1126 = vadd.f32 %v1040, %v1041
      %1127 = vadd.xlane.f32.xlu0 %v1126
      %v1128 = vpop.xlane.xlu0 %1127
      %v1129 = vadd.f32 %v1042, %v1043
      %1130 = vadd.xlane.f32.xlu0 %v1129
      %v1131 = vpop.xlane.xlu0 %1130
      %v1132 = vadd.f32 %v1044, %v1045
      %1133 = vadd.xlane.f32.xlu0 %v1132
      %v1134 = vpop.xlane.xlu0 %1133
      %v1135 = vadd.f32 %v1046, %v1047
      %1136 = vadd.xlane.f32.xlu0 %v1135
      %v1137 = vpop.xlane.xlu0 %1136
      %v1138 = vadd.f32 %v1048, %v1049
      %1139 = vadd.xlane.f32.xlu0 %v1138
      %v1140 = vpop.xlane.xlu0 %1139
      %v1141 = vadd.f32 %v1050, %v1051
      %1142 = vadd.xlane.f32.xlu0 %v1141
      %v1143 = vpop.xlane.xlu0 %1142
      %v1144 = vadd.f32 %v1052, %v1053
      %1145 = vadd.xlane.f32.xlu0 %v1144
      %v1146 = vpop.xlane.xlu0 %1145
      %v1147 = vadd.f32 %v1054, %v1055
      %1148 = vadd.xlane.f32.xlu0 %v1147
      %v1149 = vpop.xlane.xlu0 %1148
      %v1150 = vadd.f32 %v1056, %v1057
      %1151 = vadd.xlane.f32.xlu0 %v1150
      %v1152 = vpop.xlane.xlu0 %1151
      %v1153 = vadd.f32 %v1058, %v1059
      %1154 = vadd.xlane.f32.xlu0 %v1153
      %v1155 = vpop.xlane.xlu0 %1154
      %v1156 = vadd.f32 %v804, %v1062
      %v1157 = vadd.f32 %v805, %v1065
      %v1158 = vadd.f32 %v806, %v1068
      %v1159 = vadd.f32 %v807, %v1071
      %v1160 = vadd.f32 %v808, %v1074
      %v1161 = vadd.f32 %v809, %v1077
      %v1162 = vadd.f32 %v810, %v1080
      %v1163 = vadd.f32 %v811, %v1083
      %v1164 = vadd.f32 %v812, %v1086
      %v1165 = vadd.f32 %v813, %v1089
      %v1166 = vadd.f32 %v814, %v1092
      %v1167 = vadd.f32 %v815, %v1095
      %v1168 = vadd.f32 %v816, %v1098
      %v1169 = vadd.f32 %v817, %v1101
      %v1170 = vadd.f32 %v818, %v1104
      %v1171 = vadd.f32 %v819, %v1107
      %v1172 = vadd.f32 %v820, %v1110
      %v1173 = vadd.f32 %v821, %v1113
      %v1174 = vadd.f32 %v822, %v1116
      %v1175 = vadd.f32 %v823, %v1119
      %v1176 = vadd.f32 %v824, %v1122
      %v1177 = vadd.f32 %v825, %v1125
      %v1178 = vadd.f32 %v826, %v1128
      %v1179 = vadd.f32 %v827, %v1131
      %v1180 = vadd.f32 %v828, %v1134
      %v1181 = vadd.f32 %v829, %v1137
      %v1182 = vadd.f32 %v830, %v1140
      %v1183 = vadd.f32 %v831, %v1143
      %v1184 = vadd.f32 %v832, %v1146
      %v1185 = vadd.f32 %v833, %v1149
      %v1186 = vadd.f32 %v834, %v1152
      %v1187 = vadd.f32 %v835, %v1155
      %vm1188 = vcmask 7168
      %1189 = vst.msk [vmem:[#allocation4] sm:$0xff] %vm1188, %v1156
      %1190 = vst.msk [vmem:[#allocation4 + $0x8] sm:$0xff] %vm1188, %v1157
      %1191 = vst.msk [vmem:[#allocation4 + $0x10] sm:$0xff] %vm1188, %v1158
      %1192 = vst.msk [vmem:[#allocation4 + $0x18] sm:$0xff] %vm1188, %v1159
      %1193 = vst.msk [vmem:[#allocation4 + $0x20] sm:$0xff] %vm1188, %v1160
      %1194 = vst.msk [vmem:[#allocation4 + $0x28] sm:$0xff] %vm1188, %v1161
      %1195 = vst.msk [vmem:[#allocation4 + $0x30] sm:$0xff] %vm1188, %v1162
      %1196 = vst.msk [vmem:[#allocation4 + $0x38] sm:$0xff] %vm1188, %v1163
      %1197 = vst.msk [vmem:[#allocation4 + $0x40] sm:$0xff] %vm1188, %v1164
      %1198 = vst.msk [vmem:[#allocation4 + $0x48] sm:$0xff] %vm1188, %v1165
      %1199 = vst.msk [vmem:[#allocation4 + $0x50] sm:$0xff] %vm1188, %v1166
      %1200 = vst.msk [vmem:[#allocation4 + $0x58] sm:$0xff] %vm1188, %v1167
      %1201 = vst.msk [vmem:[#allocation4 + $0x60] sm:$0xff] %vm1188, %v1168
      %1202 = vst.msk [vmem:[#allocation4 + $0x68] sm:$0xff] %vm1188, %v1169
      %1203 = vst.msk [vmem:[#allocation4 + $0x70] sm:$0xff] %vm1188, %v1170
      %1204 = vst.msk [vmem:[#allocation4 + $0x78] sm:$0xff] %vm1188, %v1171
      %1205 = vst.msk [vmem:[#allocation4 + $0x80] sm:$0xff] %vm1188, %v1172
      %1206 = vst.msk [vmem:[#allocation4 + $0x88] sm:$0xff] %vm1188, %v1173
      %1207 = vst.msk [vmem:[#allocation4 + $0x90] sm:$0xff] %vm1188, %v1174
      %1208 = vst.msk [vmem:[#allocation4 + $0x98] sm:$0xff] %vm1188, %v1175
      %1209 = vst.msk [vmem:[#allocation4 + $0xa0] sm:$0xff] %vm1188, %v1176
      %1210 = vst.msk [vmem:[#allocation4 + $0xa8] sm:$0xff] %vm1188, %v1177
      %1211 = vst.msk [vmem:[#allocation4 + $0xb0] sm:$0xff] %vm1188, %v1178
      %1212 = vst.msk [vmem:[#allocation4 + $0xb8] sm:$0xff] %vm1188, %v1179
      %1213 = vst.msk [vmem:[#allocation4 + $0xc0] sm:$0xff] %vm1188, %v1180
      %1214 = vst.msk [vmem:[#allocation4 + $0xc8] sm:$0xff] %vm1188, %v1181
      %1215 = vst.msk [vmem:[#allocation4 + $0xd0] sm:$0xff] %vm1188, %v1182
      %1216 = vst.msk [vmem:[#allocation4 + $0xd8] sm:$0xff] %vm1188, %v1183
      %1217 = vst.msk [vmem:[#allocation4 + $0xe0] sm:$0xff] %vm1188, %v1184
      %1218 = vst.msk [vmem:[#allocation4 + $0xe8] sm:$0xff] %vm1188, %v1185
      %1219 = vst.msk [vmem:[#allocation4 + $0xf0] sm:$0xff] %vm1188, %v1186
      %1220 = vst.msk [vmem:[#allocation4 + $0xf8] sm:$0xff] %vm1188, %v1187
      %v1221 = vld [vmem:[#allocation2] sm:$0xff]
      %v1222 = vld [vmem:[#allocation2 + $0x8] sm:$0xff]
      %v1223 = vld [vmem:[#allocation2 + $0x10] sm:$0xff]
      %v1224 = vld [vmem:[#allocation2 + $0x18] sm:$0xff]
      %v1225 = vld [vmem:[#allocation2 + $0x20] sm:$0xff]
      %v1226 = vld [vmem:[#allocation2 + $0x28] sm:$0xff]
      %v1227 = vld [vmem:[#allocation2 + $0x30] sm:$0xff]
      %v1228 = vld [vmem:[#allocation2 + $0x38] sm:$0xff]
      %v1229 = vld [vmem:[#allocation2 + $0x40] sm:$0xff]
      %v1230 = vld [vmem:[#allocation2 + $0x48] sm:$0xff]
      %v1231 = vld [vmem:[#allocation2 + $0x50] sm:$0xff]
      %v1232 = vld [vmem:[#allocation2 + $0x58] sm:$0xff]
      %v1233 = vld [vmem:[#allocation2 + $0x60] sm:$0xff]
      %v1234 = vld [vmem:[#allocation2 + $0x68] sm:$0xff]
      %v1235 = vld [vmem:[#allocation2 + $0x70] sm:$0xff]
      %v1236 = vld [vmem:[#allocation2 + $0x78] sm:$0xff]
      %v1237 = vld [vmem:[#allocation2 + $0x80] sm:$0xff]
      %v1238 = vld [vmem:[#allocation2 + $0x88] sm:$0xff]
      %v1239 = vld [vmem:[#allocation2 + $0x90] sm:$0xff]
      %v1240 = vld [vmem:[#allocation2 + $0x98] sm:$0xff]
      %v1241 = vld [vmem:[#allocation2 + $0xa0] sm:$0xff]
      %v1242 = vld [vmem:[#allocation2 + $0xa8] sm:$0xff]
      %v1243 = vld [vmem:[#allocation2 + $0xb0] sm:$0xff]
      %v1244 = vld [vmem:[#allocation2 + $0xb8] sm:$0xff]
      %v1245 = vld [vmem:[#allocation2 + $0xc0] sm:$0xff]
      %v1246 = vld [vmem:[#allocation2 + $0xc8] sm:$0xff]
      %v1247 = vld [vmem:[#allocation2 + $0xd0] sm:$0xff]
      %v1248 = vld [vmem:[#allocation2 + $0xd8] sm:$0xff]
      %v1249 = vld [vmem:[#allocation2 + $0xe0] sm:$0xff]
      %v1250 = vld [vmem:[#allocation2 + $0xe8] sm:$0xff]
      %v1251 = vld [vmem:[#allocation2 + $0xf0] sm:$0xff]
      %v1252 = vld [vmem:[#allocation2 + $0xf8] sm:$0xff]
      %v1253 = vmax.f32 %v597, %v686
      %1254 = vmax.xlane.f32.xlu0 %v1253
      %v1255 = vpop.xlane.xlu0 %1254
      %v1256 = vmax.f32 %v599, %v688
      %1257 = vmax.xlane.f32.xlu0 %v1256
      %v1258 = vpop.xlane.xlu0 %1257
      %v1259 = vmax.f32 %v602, %v691
      %1260 = vmax.xlane.f32.xlu0 %v1259
      %v1261 = vpop.xlane.xlu0 %1260
      %v1262 = vmax.f32 %v604, %v693
      %1263 = vmax.xlane.f32.xlu0 %v1262
      %v1264 = vpop.xlane.xlu0 %1263
      %v1265 = vmax.f32 %v607, %v696
      %1266 = vmax.xlane.f32.xlu0 %v1265
      %v1267 = vpop.xlane.xlu0 %1266
      %v1268 = vmax.f32 %v609, %v698
      %1269 = vmax.xlane.f32.xlu0 %v1268
      %v1270 = vpop.xlane.xlu0 %1269
      %v1271 = vmax.f32 %v612, %v701
      %1272 = vmax.xlane.f32.xlu0 %v1271
      %v1273 = vpop.xlane.xlu0 %1272
      %v1274 = vmax.f32 %v614, %v703
      %1275 = vmax.xlane.f32.xlu0 %v1274
      %v1276 = vpop.xlane.xlu0 %1275
      %v1277 = vmax.f32 %v617, %v706
      %1278 = vmax.xlane.f32.xlu0 %v1277
      %v1279 = vpop.xlane.xlu0 %1278
      %v1280 = vmax.f32 %v619, %v708
      %1281 = vmax.xlane.f32.xlu0 %v1280
      %v1282 = vpop.xlane.xlu0 %1281
      %v1283 = vmax.f32 %v622, %v711
      %1284 = vmax.xlane.f32.xlu0 %v1283
      %v1285 = vpop.xlane.xlu0 %1284
      %v1286 = vmax.f32 %v624, %v713
      %1287 = vmax.xlane.f32.xlu0 %v1286
      %v1288 = vpop.xlane.xlu0 %1287
      %v1289 = vmax.f32 %v627, %v716
      %1290 = vmax.xlane.f32.xlu0 %v1289
      %v1291 = vpop.xlane.xlu0 %1290
      %v1292 = vmax.f32 %v629, %v718
      %1293 = vmax.xlane.f32.xlu0 %v1292
      %v1294 = vpop.xlane.xlu0 %1293
      %v1295 = vmax.f32 %v632, %v721
      %1296 = vmax.xlane.f32.xlu0 %v1295
      %v1297 = vpop.xlane.xlu0 %1296
      %v1298 = vmax.f32 %v634, %v723
      %1299 = vmax.xlane.f32.xlu0 %v1298
      %v1300 = vpop.xlane.xlu0 %1299
      %v1301 = vmax.f32 %v637, %v726
      %1302 = vmax.xlane.f32.xlu0 %v1301
      %v1303 = vpop.xlane.xlu0 %1302
      %v1304 = vmax.f32 %v639, %v728
      %1305 = vmax.xlane.f32.xlu0 %v1304
      %v1306 = vpop.xlane.xlu0 %1305
      %v1307 = vmax.f32 %v642, %v731
      %1308 = vmax.xlane.f32.xlu0 %v1307
      %v1309 = vpop.xlane.xlu0 %1308
      %v1310 = vmax.f32 %v644, %v733
      %1311 = vmax.xlane.f32.xlu0 %v1310
      %v1312 = vpop.xlane.xlu0 %1311
      %v1313 = vmax.f32 %v647, %v736
      %1314 = vmax.xlane.f32.xlu0 %v1313
      %v1315 = vpop.xlane.xlu0 %1314
      %v1316 = vmax.f32 %v649, %v738
      %1317 = vmax.xlane.f32.xlu0 %v1316
      %v1318 = vpop.xlane.xlu0 %1317
      %v1319 = vmax.f32 %v652, %v741
      %1320 = vmax.xlane.f32.xlu0 %v1319
      %v1321 = vpop.xlane.xlu0 %1320
      %v1322 = vmax.f32 %v654, %v743
      %1323 = vmax.xlane.f32.xlu0 %v1322
      %v1324 = vpop.xlane.xlu0 %1323
      %v1325 = vmax.f32 %v657, %v746
      %1326 = vmax.xlane.f32.xlu0 %v1325
      %v1327 = vpop.xlane.xlu0 %1326
      %v1328 = vmax.f32 %v659, %v748
      %1329 = vmax.xlane.f32.xlu0 %v1328
      %v1330 = vpop.xlane.xlu0 %1329
      %v1331 = vmax.f32 %v662, %v751
      %1332 = vmax.xlane.f32.xlu0 %v1331
      %v1333 = vpop.xlane.xlu0 %1332
      %v1334 = vmax.f32 %v664, %v753
      %1335 = vmax.xlane.f32.xlu0 %v1334
      %v1336 = vpop.xlane.xlu0 %1335
      %v1337 = vmax.f32 %v667, %v756
      %1338 = vmax.xlane.f32.xlu0 %v1337
      %v1339 = vpop.xlane.xlu0 %1338
      %v1340 = vmax.f32 %v669, %v758
      %1341 = vmax.xlane.f32.xlu0 %v1340
      %v1342 = vpop.xlane.xlu0 %1341
      %v1343 = vmax.f32 %v672, %v761
      %1344 = vmax.xlane.f32.xlu0 %v1343
      %v1345 = vpop.xlane.xlu0 %1344
      %v1346 = vmax.f32 %v674, %v763
      %1347 = vmax.xlane.f32.xlu0 %v1346
      %v1348 = vpop.xlane.xlu0 %1347
      %v1349 = vmax.f32 %v1221, %v1255
      %v1350 = vmax.f32 %v1222, %v1258
      %v1351 = vmax.f32 %v1223, %v1261
      %v1352 = vmax.f32 %v1224, %v1264
      %v1353 = vmax.f32 %v1225, %v1267
      %v1354 = vmax.f32 %v1226, %v1270
      %v1355 = vmax.f32 %v1227, %v1273
      %v1356 = vmax.f32 %v1228, %v1276
      %v1357 = vmax.f32 %v1229, %v1279
      %v1358 = vmax.f32 %v1230, %v1282
      %v1359 = vmax.f32 %v1231, %v1285
      %v1360 = vmax.f32 %v1232, %v1288
      %v1361 = vmax.f32 %v1233, %v1291
      %v1362 = vmax.f32 %v1234, %v1294
      %v1363 = vmax.f32 %v1235, %v1297
      %v1364 = vmax.f32 %v1236, %v1300
      %v1365 = vmax.f32 %v1237, %v1303
      %v1366 = vmax.f32 %v1238, %v1306
      %v1367 = vmax.f32 %v1239, %v1309
      %v1368 = vmax.f32 %v1240, %v1312
      %v1369 = vmax.f32 %v1241, %v1315
      %v1370 = vmax.f32 %v1242, %v1318
      %v1371 = vmax.f32 %v1243, %v1321
      %v1372 = vmax.f32 %v1244, %v1324
      %v1373 = vmax.f32 %v1245, %v1327
      %v1374 = vmax.f32 %v1246, %v1330
      %v1375 = vmax.f32 %v1247, %v1333
      %v1376 = vmax.f32 %v1248, %v1336
      %v1377 = vmax.f32 %v1249, %v1339
      %v1378 = vmax.f32 %v1250, %v1342
      %v1379 = vmax.f32 %v1251, %v1345
      %v1380 = vmax.f32 %v1252, %v1348
      %v1381 = vsub.f32 %v1221, %v1349
      %v1382 = vsub.f32 %v1222, %v1350
      %v1383 = vsub.f32 %v1223, %v1351
      %v1384 = vsub.f32 %v1224, %v1352
      %v1385 = vsub.f32 %v1225, %v1353
      %v1386 = vsub.f32 %v1226, %v1354
      %v1387 = vsub.f32 %v1227, %v1355
      %v1388 = vsub.f32 %v1228, %v1356
      %v1389 = vsub.f32 %v1229, %v1357
      %v1390 = vsub.f32 %v1230, %v1358
      %v1391 = vsub.f32 %v1231, %v1359
      %v1392 = vsub.f32 %v1232, %v1360
      %v1393 = vsub.f32 %v1233, %v1361
      %v1394 = vsub.f32 %v1234, %v1362
      %v1395 = vsub.f32 %v1235, %v1363
      %v1396 = vsub.f32 %v1236, %v1364
      %v1397 = vsub.f32 %v1237, %v1365
      %v1398 = vsub.f32 %v1238, %v1366
      %v1399 = vsub.f32 %v1239, %v1367
      %v1400 = vsub.f32 %v1240, %v1368
      %v1401 = vsub.f32 %v1241, %v1369
      %v1402 = vsub.f32 %v1242, %v1370
      %v1403 = vsub.f32 %v1243, %v1371
      %v1404 = vsub.f32 %v1244, %v1372
      %v1405 = vsub.f32 %v1245, %v1373
      %v1406 = vsub.f32 %v1246, %v1374
      %v1407 = vsub.f32 %v1247, %v1375
      %v1408 = vsub.f32 %v1248, %v1376
      %v1409 = vsub.f32 %v1249, %v1377
      %v1410 = vsub.f32 %v1250, %v1378
      %v1411 = vsub.f32 %v1251, %v1379
      %v1412 = vsub.f32 %v1252, %v1380
      %v1413 = vmul.f32 %v1381, 1.442695
      %v1414 = vpow.pop %v1413
      %v1415 = vmul.f32 %v1382, 1.442695
      %v1416 = vpow.pop %v1415
      %v1417 = vmul.f32 %v1383, 1.442695
      %v1418 = vpow.pop %v1417
      %v1419 = vmul.f32 %v1384, 1.442695
      %v1420 = vpow.pop %v1419
      %v1421 = vmul.f32 %v1385, 1.442695
      %v1422 = vpow.pop %v1421
      %v1423 = vmul.f32 %v1386, 1.442695
      %v1424 = vpow.pop %v1423
      %v1425 = vmul.f32 %v1387, 1.442695
      %v1426 = vpow.pop %v1425
      %v1427 = vmul.f32 %v1388, 1.442695
      %v1428 = vpow.pop %v1427
      %v1429 = vmul.f32 %v1389, 1.442695
      %v1430 = vpow.pop %v1429
      %v1431 = vmul.f32 %v1390, 1.442695
      %v1432 = vpow.pop %v1431
      %v1433 = vmul.f32 %v1391, 1.442695
      %v1434 = vpow.pop %v1433
      %v1435 = vmul.f32 %v1392, 1.442695
      %v1436 = vpow.pop %v1435
      %v1437 = vmul.f32 %v1393, 1.442695
      %v1438 = vpow.pop %v1437
      %v1439 = vmul.f32 %v1394, 1.442695
      %v1440 = vpow.pop %v1439
      %v1441 = vmul.f32 %v1395, 1.442695
      %v1442 = vpow.pop %v1441
      %v1443 = vmul.f32 %v1396, 1.442695
      %v1444 = vpow.pop %v1443
      %v1445 = vmul.f32 %v1397, 1.442695
      %v1446 = vpow.pop %v1445
      %v1447 = vmul.f32 %v1398, 1.442695
      %v1448 = vpow.pop %v1447
      %v1449 = vmul.f32 %v1399, 1.442695
      %v1450 = vpow.pop %v1449
      %v1451 = vmul.f32 %v1400, 1.442695
      %v1452 = vpow.pop %v1451
      %v1453 = vmul.f32 %v1401, 1.442695
      %v1454 = vpow.pop %v1453
      %v1455 = vmul.f32 %v1402, 1.442695
      %v1456 = vpow.pop %v1455
      %v1457 = vmul.f32 %v1403, 1.442695
      %v1458 = vpow.pop %v1457
      %v1459 = vmul.f32 %v1404, 1.442695
      %v1460 = vpow.pop %v1459
      %v1461 = vmul.f32 %v1405, 1.442695
      %v1462 = vpow.pop %v1461
      %v1463 = vmul.f32 %v1406, 1.442695
      %v1464 = vpow.pop %v1463
      %v1465 = vmul.f32 %v1407, 1.442695
      %v1466 = vpow.pop %v1465
      %v1467 = vmul.f32 %v1408, 1.442695
      %v1468 = vpow.pop %v1467
      %v1469 = vmul.f32 %v1409, 1.442695
      %v1470 = vpow.pop %v1469
      %v1471 = vmul.f32 %v1410, 1.442695
      %v1472 = vpow.pop %v1471
      %v1473 = vmul.f32 %v1411, 1.442695
      %v1474 = vpow.pop %v1473
      %v1475 = vmul.f32 %v1412, 1.442695
      %v1476 = vpow.pop %v1475
      %v1477 = vld [vmem:[#allocation3] sm:$0xff]
      %v1478 = vld [vmem:[#allocation3 + $0x8] sm:$0xff]
      %v1479 = vld [vmem:[#allocation3 + $0x10] sm:$0xff]
      %v1480 = vld [vmem:[#allocation3 + $0x18] sm:$0xff]
      %v1481 = vld [vmem:[#allocation3 + $0x20] sm:$0xff]
      %v1482 = vld [vmem:[#allocation3 + $0x28] sm:$0xff]
      %v1483 = vld [vmem:[#allocation3 + $0x30] sm:$0xff]
      %v1484 = vld [vmem:[#allocation3 + $0x38] sm:$0xff]
      %v1485 = vld [vmem:[#allocation3 + $0x40] sm:$0xff]
      %v1486 = vld [vmem:[#allocation3 + $0x48] sm:$0xff]
      %v1487 = vld [vmem:[#allocation3 + $0x50] sm:$0xff]
      %v1488 = vld [vmem:[#allocation3 + $0x58] sm:$0xff]
      %v1489 = vld [vmem:[#allocation3 + $0x60] sm:$0xff]
      %v1490 = vld [vmem:[#allocation3 + $0x68] sm:$0xff]
      %v1491 = vld [vmem:[#allocation3 + $0x70] sm:$0xff]
      %v1492 = vld [vmem:[#allocation3 + $0x78] sm:$0xff]
      %v1493 = vld [vmem:[#allocation3 + $0x80] sm:$0xff]
      %v1494 = vld [vmem:[#allocation3 + $0x88] sm:$0xff]
      %v1495 = vld [vmem:[#allocation3 + $0x90] sm:$0xff]
      %v1496 = vld [vmem:[#allocation3 + $0x98] sm:$0xff]
      %v1497 = vld [vmem:[#allocation3 + $0xa0] sm:$0xff]
      %v1498 = vld [vmem:[#allocation3 + $0xa8] sm:$0xff]
      %v1499 = vld [vmem:[#allocation3 + $0xb0] sm:$0xff]
      %v1500 = vld [vmem:[#allocation3 + $0xb8] sm:$0xff]
      %v1501 = vld [vmem:[#allocation3 + $0xc0] sm:$0xff]
      %v1502 = vld [vmem:[#allocation3 + $0xc8] sm:$0xff]
      %v1503 = vld [vmem:[#allocation3 + $0xd0] sm:$0xff]
      %v1504 = vld [vmem:[#allocation3 + $0xd8] sm:$0xff]
      %v1505 = vld [vmem:[#allocation3 + $0xe0] sm:$0xff]
      %v1506 = vld [vmem:[#allocation3 + $0xe8] sm:$0xff]
      %v1507 = vld [vmem:[#allocation3 + $0xf0] sm:$0xff]
      %v1508 = vld [vmem:[#allocation3 + $0xf8] sm:$0xff]
      %v1509 = vmul.f32 %v1414, %v1477
      %v1510 = vmul.f32 %v1416, %v1478
      %v1511 = vmul.f32 %v1418, %v1479
      %v1512 = vmul.f32 %v1420, %v1480
      %v1513 = vmul.f32 %v1422, %v1481
      %v1514 = vmul.f32 %v1424, %v1482
      %v1515 = vmul.f32 %v1426, %v1483
      %v1516 = vmul.f32 %v1428, %v1484
      %v1517 = vmul.f32 %v1430, %v1485
      %v1518 = vmul.f32 %v1432, %v1486
      %v1519 = vmul.f32 %v1434, %v1487
      %v1520 = vmul.f32 %v1436, %v1488
      %v1521 = vmul.f32 %v1438, %v1489
      %v1522 = vmul.f32 %v1440, %v1490
      %v1523 = vmul.f32 %v1442, %v1491
      %v1524 = vmul.f32 %v1444, %v1492
      %v1525 = vmul.f32 %v1446, %v1493
      %v1526 = vmul.f32 %v1448, %v1494
      %v1527 = vmul.f32 %v1450, %v1495
      %v1528 = vmul.f32 %v1452, %v1496
      %v1529 = vmul.f32 %v1454, %v1497
      %v1530 = vmul.f32 %v1456, %v1498
      %v1531 = vmul.f32 %v1458, %v1499
      %v1532 = vmul.f32 %v1460, %v1500
      %v1533 = vmul.f32 %v1462, %v1501
      %v1534 = vmul.f32 %v1464, %v1502
      %v1535 = vmul.f32 %v1466, %v1503
      %v1536 = vmul.f32 %v1468, %v1504
      %v1537 = vmul.f32 %v1470, %v1505
      %v1538 = vmul.f32 %v1472, %v1506
      %v1539 = vmul.f32 %v1474, %v1507
      %v1540 = vmul.f32 %v1476, %v1508
      %1542 = vset.pattern.permute.xlu0 0
      %1543 = vperm.xlu0 %1542, %v1349
      %v1544 = vpop.permute.xlu0 %1543
      %1547 = vset.pattern.permute.xlu0 0
      %1548 = vperm.xlu0 %1547, %v1350
      %v1549 = vpop.permute.xlu0 %1548
      %1552 = vset.pattern.permute.xlu0 0
      %1553 = vperm.xlu0 %1552, %v1351
      %v1554 = vpop.permute.xlu0 %1553
      %1557 = vset.pattern.permute.xlu0 0
      %1558 = vperm.xlu0 %1557, %v1352
      %v1559 = vpop.permute.xlu0 %1558
      %1562 = vset.pattern.permute.xlu0 0
      %1563 = vperm.xlu0 %1562, %v1353
      %v1564 = vpop.permute.xlu0 %1563
      %1567 = vset.pattern.permute.xlu0 0
      %1568 = vperm.xlu0 %1567, %v1354
      %v1569 = vpop.permute.xlu0 %1568
      %1572 = vset.pattern.permute.xlu0 0
      %1573 = vperm.xlu0 %1572, %v1355
      %v1574 = vpop.permute.xlu0 %1573
      %1577 = vset.pattern.permute.xlu0 0
      %1578 = vperm.xlu0 %1577, %v1356
      %v1579 = vpop.permute.xlu0 %1578
      %1582 = vset.pattern.permute.xlu0 0
      %1583 = vperm.xlu0 %1582, %v1357
      %v1584 = vpop.permute.xlu0 %1583
      %1587 = vset.pattern.permute.xlu0 0
      %1588 = vperm.xlu0 %1587, %v1358
      %v1589 = vpop.permute.xlu0 %1588
      %1592 = vset.pattern.permute.xlu0 0
      %1593 = vperm.xlu0 %1592, %v1359
      %v1594 = vpop.permute.xlu0 %1593
      %1597 = vset.pattern.permute.xlu0 0
      %1598 = vperm.xlu0 %1597, %v1360
      %v1599 = vpop.permute.xlu0 %1598
      %1602 = vset.pattern.permute.xlu0 0
      %1603 = vperm.xlu0 %1602, %v1361
      %v1604 = vpop.permute.xlu0 %1603
      %1607 = vset.pattern.permute.xlu0 0
      %1608 = vperm.xlu0 %1607, %v1362
      %v1609 = vpop.permute.xlu0 %1608
      %1612 = vset.pattern.permute.xlu0 0
      %1613 = vperm.xlu0 %1612, %v1363
      %v1614 = vpop.permute.xlu0 %1613
      %1617 = vset.pattern.permute.xlu0 0
      %1618 = vperm.xlu0 %1617, %v1364
      %v1619 = vpop.permute.xlu0 %1618
      %1622 = vset.pattern.permute.xlu0 0
      %1623 = vperm.xlu0 %1622, %v1365
      %v1624 = vpop.permute.xlu0 %1623
      %1627 = vset.pattern.permute.xlu0 0
      %1628 = vperm.xlu0 %1627, %v1366
      %v1629 = vpop.permute.xlu0 %1628
      %1632 = vset.pattern.permute.xlu0 0
      %1633 = vperm.xlu0 %1632, %v1367
      %v1634 = vpop.permute.xlu0 %1633
      %1637 = vset.pattern.permute.xlu0 0
      %1638 = vperm.xlu0 %1637, %v1368
      %v1639 = vpop.permute.xlu0 %1638
      %1642 = vset.pattern.permute.xlu0 0
      %1643 = vperm.xlu0 %1642, %v1369
      %v1644 = vpop.permute.xlu0 %1643
      %1647 = vset.pattern.permute.xlu0 0
      %1648 = vperm.xlu0 %1647, %v1370
      %v1649 = vpop.permute.xlu0 %1648
      %1652 = vset.pattern.permute.xlu0 0
      %1653 = vperm.xlu0 %1652, %v1371
      %v1654 = vpop.permute.xlu0 %1653
      %1657 = vset.pattern.permute.xlu0 0
      %1658 = vperm.xlu0 %1657, %v1372
      %v1659 = vpop.permute.xlu0 %1658
      %1662 = vset.pattern.permute.xlu0 0
      %1663 = vperm.xlu0 %1662, %v1373
      %v1664 = vpop.permute.xlu0 %1663
      %1667 = vset.pattern.permute.xlu0 0
      %1668 = vperm.xlu0 %1667, %v1374
      %v1669 = vpop.permute.xlu0 %1668
      %1672 = vset.pattern.permute.xlu0 0
      %1673 = vperm.xlu0 %1672, %v1375
      %v1674 = vpop.permute.xlu0 %1673
      %1677 = vset.pattern.permute.xlu0 0
      %1678 = vperm.xlu0 %1677, %v1376
      %v1679 = vpop.permute.xlu0 %1678
      %1682 = vset.pattern.permute.xlu0 0
      %1683 = vperm.xlu0 %1682, %v1377
      %v1684 = vpop.permute.xlu0 %1683
      %1687 = vset.pattern.permute.xlu0 0
      %1688 = vperm.xlu0 %1687, %v1378
      %v1689 = vpop.permute.xlu0 %1688
      %1692 = vset.pattern.permute.xlu0 0
      %1693 = vperm.xlu0 %1692, %v1379
      %v1694 = vpop.permute.xlu0 %1693
      %1697 = vset.pattern.permute.xlu0 0
      %1698 = vperm.xlu0 %1697, %v1380
      %v1699 = vpop.permute.xlu0 %1698
      %v1701 = vsub.f32 %v597, %v1544
      %v1702 = vsub.f32 %v686, %v1544
      %v1703 = vsub.f32 %v599, %v1549
      %v1704 = vsub.f32 %v688, %v1549
      %v1705 = vsub.f32 %v602, %v1554
      %v1706 = vsub.f32 %v691, %v1554
      %v1707 = vsub.f32 %v604, %v1559
      %v1708 = vsub.f32 %v693, %v1559
      %v1709 = vsub.f32 %v607, %v1564
      %v1710 = vsub.f32 %v696, %v1564
      %v1711 = vsub.f32 %v609, %v1569
      %v1712 = vsub.f32 %v698, %v1569
      %v1713 = vsub.f32 %v612, %v1574
      %v1714 = vsub.f32 %v701, %v1574
      %v1715 = vsub.f32 %v614, %v1579
      %v1716 = vsub.f32 %v703, %v1579
      %v1717 = vsub.f32 %v617, %v1584
      %v1718 = vsub.f32 %v706, %v1584
      %v1719 = vsub.f32 %v619, %v1589
      %v1720 = vsub.f32 %v708, %v1589
      %v1721 = vsub.f32 %v622, %v1594
      %v1722 = vsub.f32 %v711, %v1594
      %v1723 = vsub.f32 %v624, %v1599
      %v1724 = vsub.f32 %v713, %v1599
      %v1725 = vsub.f32 %v627, %v1604
      %v1726 = vsub.f32 %v716, %v1604
      %v1727 = vsub.f32 %v629, %v1609
      %v1728 = vsub.f32 %v718, %v1609
      %v1729 = vsub.f32 %v632, %v1614
      %v1730 = vsub.f32 %v721, %v1614
      %v1731 = vsub.f32 %v634, %v1619
      %v1732 = vsub.f32 %v723, %v1619
      %v1733 = vsub.f32 %v637, %v1624
      %v1734 = vsub.f32 %v726, %v1624
      %v1735 = vsub.f32 %v639, %v1629
      %v1736 = vsub.f32 %v728, %v1629
      %v1737 = vsub.f32 %v642, %v1634
      %v1738 = vsub.f32 %v731, %v1634
      %v1739 = vsub.f32 %v644, %v1639
      %v1740 = vsub.f32 %v733, %v1639
      %v1741 = vsub.f32 %v647, %v1644
      %v1742 = vsub.f32 %v736, %v1644
      %v1743 = vsub.f32 %v649, %v1649
      %v1744 = vsub.f32 %v738, %v1649
      %v1745 = vsub.f32 %v652, %v1654
      %v1746 = vsub.f32 %v741, %v1654
      %v1747 = vsub.f32 %v654, %v1659
      %v1748 = vsub.f32 %v743, %v1659
      %v1749 = vsub.f32 %v657, %v1664
      %v1750 = vsub.f32 %v746, %v1664
      %v1751 = vsub.f32 %v659, %v1669
      %v1752 = vsub.f32 %v748, %v1669
      %v1753 = vsub.f32 %v662, %v1674
      %v1754 = vsub.f32 %v751, %v1674
      %v1755 = vsub.f32 %v664, %v1679
      %v1756 = vsub.f32 %v753, %v1679
      %v1757 = vsub.f32 %v667, %v1684
      %v1758 = vsub.f32 %v756, %v1684
      %v1759 = vsub.f32 %v669, %v1689
      %v1760 = vsub.f32 %v758, %v1689
      %v1761 = vsub.f32 %v672, %v1694
      %v1762 = vsub.f32 %v761, %v1694
      %v1763 = vsub.f32 %v674, %v1699
      %v1764 = vsub.f32 %v763, %v1699
      %v1765 = vmul.f32 %v1701, 1.442695
      %v1766 = vpow.pop %v1765
      %v1767 = vmul.f32 %v1702, 1.442695
      %v1768 = vpow.pop %v1767
      %v1769 = vmul.f32 %v1703, 1.442695
      %v1770 = vpow.pop %v1769
      %v1771 = vmul.f32 %v1704, 1.442695
      %v1772 = vpow.pop %v1771
      %v1773 = vmul.f32 %v1705, 1.442695
      %v1774 = vpow.pop %v1773
      %v1775 = vmul.f32 %v1706, 1.442695
      %v1776 = vpow.pop %v1775
      %v1777 = vmul.f32 %v1707, 1.442695
      %v1778 = vpow.pop %v1777
      %v1779 = vmul.f32 %v1708, 1.442695
      %v1780 = vpow.pop %v1779
      %v1781 = vmul.f32 %v1709, 1.442695
      %v1782 = vpow.pop %v1781
      %v1783 = vmul.f32 %v1710, 1.442695
      %v1784 = vpow.pop %v1783
      %v1785 = vmul.f32 %v1711, 1.442695
      %v1786 = vpow.pop %v1785
      %v1787 = vmul.f32 %v1712, 1.442695
      %v1788 = vpow.pop %v1787
      %v1789 = vmul.f32 %v1713, 1.442695
      %v1790 = vpow.pop %v1789
      %v1791 = vmul.f32 %v1714, 1.442695
      %v1792 = vpow.pop %v1791
      %v1793 = vmul.f32 %v1715, 1.442695
      %v1794 = vpow.pop %v1793
      %v1795 = vmul.f32 %v1716, 1.442695
      %v1796 = vpow.pop %v1795
      %v1797 = vmul.f32 %v1717, 1.442695
      %v1798 = vpow.pop %v1797
      %v1799 = vmul.f32 %v1718, 1.442695
      %v1800 = vpow.pop %v1799
      %v1801 = vmul.f32 %v1719, 1.442695
      %v1802 = vpow.pop %v1801
      %v1803 = vmul.f32 %v1720, 1.442695
      %v1804 = vpow.pop %v1803
      %v1805 = vmul.f32 %v1721, 1.442695
      %v1806 = vpow.pop %v1805
      %v1807 = vmul.f32 %v1722, 1.442695
      %v1808 = vpow.pop %v1807
      %v1809 = vmul.f32 %v1723, 1.442695
      %v1810 = vpow.pop %v1809
      %v1811 = vmul.f32 %v1724, 1.442695
      %v1812 = vpow.pop %v1811
      %v1813 = vmul.f32 %v1725, 1.442695
      %v1814 = vpow.pop %v1813
      %v1815 = vmul.f32 %v1726, 1.442695
      %v1816 = vpow.pop %v1815
      %v1817 = vmul.f32 %v1727, 1.442695
      %v1818 = vpow.pop %v1817
      %v1819 = vmul.f32 %v1728, 1.442695
      %v1820 = vpow.pop %v1819
      %v1821 = vmul.f32 %v1729, 1.442695
      %v1822 = vpow.pop %v1821
      %v1823 = vmul.f32 %v1730, 1.442695
      %v1824 = vpow.pop %v1823
      %v1825 = vmul.f32 %v1731, 1.442695
      %v1826 = vpow.pop %v1825
      %v1827 = vmul.f32 %v1732, 1.442695
      %v1828 = vpow.pop %v1827
      %v1829 = vmul.f32 %v1733, 1.442695
      %v1830 = vpow.pop %v1829
      %v1831 = vmul.f32 %v1734, 1.442695
      %v1832 = vpow.pop %v1831
      %v1833 = vmul.f32 %v1735, 1.442695
      %v1834 = vpow.pop %v1833
      %v1835 = vmul.f32 %v1736, 1.442695
      %v1836 = vpow.pop %v1835
      %v1837 = vmul.f32 %v1737, 1.442695
      %v1838 = vpow.pop %v1837
      %v1839 = vmul.f32 %v1738, 1.442695
      %v1840 = vpow.pop %v1839
      %v1841 = vmul.f32 %v1739, 1.442695
      %v1842 = vpow.pop %v1841
      %v1843 = vmul.f32 %v1740, 1.442695
      %v1844 = vpow.pop %v1843
      %v1845 = vmul.f32 %v1741, 1.442695
      %v1846 = vpow.pop %v1845
      %v1847 = vmul.f32 %v1742, 1.442695
      %v1848 = vpow.pop %v1847
      %v1849 = vmul.f32 %v1743, 1.442695
      %v1850 = vpow.pop %v1849
      %v1851 = vmul.f32 %v1744, 1.442695
      %v1852 = vpow.pop %v1851
      %v1853 = vmul.f32 %v1745, 1.442695
      %v1854 = vpow.pop %v1853
      %v1855 = vmul.f32 %v1746, 1.442695
      %v1856 = vpow.pop %v1855
      %v1857 = vmul.f32 %v1747, 1.442695
      %v1858 = vpow.pop %v1857
      %v1859 = vmul.f32 %v1748, 1.442695
      %v1860 = vpow.pop %v1859
      %v1861 = vmul.f32 %v1749, 1.442695
      %v1862 = vpow.pop %v1861
      %v1863 = vmul.f32 %v1750, 1.442695
      %v1864 = vpow.pop %v1863
      %v1865 = vmul.f32 %v1751, 1.442695
      %v1866 = vpow.pop %v1865
      %v1867 = vmul.f32 %v1752, 1.442695
      %v1868 = vpow.pop %v1867
      %v1869 = vmul.f32 %v1753, 1.442695
      %v1870 = vpow.pop %v1869
      %v1871 = vmul.f32 %v1754, 1.442695
      %v1872 = vpow.pop %v1871
      %v1873 = vmul.f32 %v1755, 1.442695
      %v1874 = vpow.pop %v1873
      %v1875 = vmul.f32 %v1756, 1.442695
      %v1876 = vpow.pop %v1875
      %v1877 = vmul.f32 %v1757, 1.442695
      %v1878 = vpow.pop %v1877
      %v1879 = vmul.f32 %v1758, 1.442695
      %v1880 = vpow.pop %v1879
      %v1881 = vmul.f32 %v1759, 1.442695
      %v1882 = vpow.pop %v1881
      %v1883 = vmul.f32 %v1760, 1.442695
      %v1884 = vpow.pop %v1883
      %v1885 = vmul.f32 %v1761, 1.442695
      %v1886 = vpow.pop %v1885
      %v1887 = vmul.f32 %v1762, 1.442695
      %v1888 = vpow.pop %v1887
      %v1889 = vmul.f32 %v1763, 1.442695
      %v1890 = vpow.pop %v1889
      %v1891 = vmul.f32 %v1764, 1.442695
      %v1892 = vpow.pop %v1891
      %v1893 = vadd.f32 %v1766, %v1768
      %1894 = vadd.xlane.f32.xlu0 %v1893
      %v1895 = vpop.xlane.xlu0 %1894
      %v1896 = vadd.f32 %v1770, %v1772
      %1897 = vadd.xlane.f32.xlu0 %v1896
      %v1898 = vpop.xlane.xlu0 %1897
      %v1899 = vadd.f32 %v1774, %v1776
      %1900 = vadd.xlane.f32.xlu0 %v1899
      %v1901 = vpop.xlane.xlu0 %1900
      %v1902 = vadd.f32 %v1778, %v1780
      %1903 = vadd.xlane.f32.xlu0 %v1902
      %v1904 = vpop.xlane.xlu0 %1903
      %v1905 = vadd.f32 %v1782, %v1784
      %1906 = vadd.xlane.f32.xlu0 %v1905
      %v1907 = vpop.xlane.xlu0 %1906
      %v1908 = vadd.f32 %v1786, %v1788
      %1909 = vadd.xlane.f32.xlu0 %v1908
      %v1910 = vpop.xlane.xlu0 %1909
      %v1911 = vadd.f32 %v1790, %v1792
      %1912 = vadd.xlane.f32.xlu0 %v1911
      %v1913 = vpop.xlane.xlu0 %1912
      %v1914 = vadd.f32 %v1794, %v1796
      %1915 = vadd.xlane.f32.xlu0 %v1914
      %v1916 = vpop.xlane.xlu0 %1915
      %v1917 = vadd.f32 %v1798, %v1800
      %1918 = vadd.xlane.f32.xlu0 %v1917
      %v1919 = vpop.xlane.xlu0 %1918
      %v1920 = vadd.f32 %v1802, %v1804
      %1921 = vadd.xlane.f32.xlu0 %v1920
      %v1922 = vpop.xlane.xlu0 %1921
      %v1923 = vadd.f32 %v1806, %v1808
      %1924 = vadd.xlane.f32.xlu0 %v1923
      %v1925 = vpop.xlane.xlu0 %1924
      %v1926 = vadd.f32 %v1810, %v1812
      %1927 = vadd.xlane.f32.xlu0 %v1926
      %v1928 = vpop.xlane.xlu0 %1927
      %v1929 = vadd.f32 %v1814, %v1816
      %1930 = vadd.xlane.f32.xlu0 %v1929
      %v1931 = vpop.xlane.xlu0 %1930
      %v1932 = vadd.f32 %v1818, %v1820
      %1933 = vadd.xlane.f32.xlu0 %v1932
      %v1934 = vpop.xlane.xlu0 %1933
      %v1935 = vadd.f32 %v1822, %v1824
      %1936 = vadd.xlane.f32.xlu0 %v1935
      %v1937 = vpop.xlane.xlu0 %1936
      %v1938 = vadd.f32 %v1826, %v1828
      %1939 = vadd.xlane.f32.xlu0 %v1938
      %v1940 = vpop.xlane.xlu0 %1939
      %v1941 = vadd.f32 %v1830, %v1832
      %1942 = vadd.xlane.f32.xlu0 %v1941
      %v1943 = vpop.xlane.xlu0 %1942
      %v1944 = vadd.f32 %v1834, %v1836
      %1945 = vadd.xlane.f32.xlu0 %v1944
      %v1946 = vpop.xlane.xlu0 %1945
      %v1947 = vadd.f32 %v1838, %v1840
      %1948 = vadd.xlane.f32.xlu0 %v1947
      %v1949 = vpop.xlane.xlu0 %1948
      %v1950 = vadd.f32 %v1842, %v1844
      %1951 = vadd.xlane.f32.xlu0 %v1950
      %v1952 = vpop.xlane.xlu0 %1951
      %v1953 = vadd.f32 %v1846, %v1848
      %1954 = vadd.xlane.f32.xlu0 %v1953
      %v1955 = vpop.xlane.xlu0 %1954
      %v1956 = vadd.f32 %v1850, %v1852
      %1957 = vadd.xlane.f32.xlu0 %v1956
      %v1958 = vpop.xlane.xlu0 %1957
      %v1959 = vadd.f32 %v1854, %v1856
      %1960 = vadd.xlane.f32.xlu0 %v1959
      %v1961 = vpop.xlane.xlu0 %1960
      %v1962 = vadd.f32 %v1858, %v1860
      %1963 = vadd.xlane.f32.xlu0 %v1962
      %v1964 = vpop.xlane.xlu0 %1963
      %v1965 = vadd.f32 %v1862, %v1864
      %1966 = vadd.xlane.f32.xlu0 %v1965
      %v1967 = vpop.xlane.xlu0 %1966
      %v1968 = vadd.f32 %v1866, %v1868
      %1969 = vadd.xlane.f32.xlu0 %v1968
      %v1970 = vpop.xlane.xlu0 %1969
      %v1971 = vadd.f32 %v1870, %v1872
      %1972 = vadd.xlane.f32.xlu0 %v1971
      %v1973 = vpop.xlane.xlu0 %1972
      %v1974 = vadd.f32 %v1874, %v1876
      %1975 = vadd.xlane.f32.xlu0 %v1974
      %v1976 = vpop.xlane.xlu0 %1975
      %v1977 = vadd.f32 %v1878, %v1880
      %1978 = vadd.xlane.f32.xlu0 %v1977
      %v1979 = vpop.xlane.xlu0 %1978
      %v1980 = vadd.f32 %v1882, %v1884
      %1981 = vadd.xlane.f32.xlu0 %v1980
      %v1982 = vpop.xlane.xlu0 %1981
      %v1983 = vadd.f32 %v1886, %v1888
      %1984 = vadd.xlane.f32.xlu0 %v1983
      %v1985 = vpop.xlane.xlu0 %1984
      %v1986 = vadd.f32 %v1890, %v1892
      %1987 = vadd.xlane.f32.xlu0 %v1986
      %v1988 = vpop.xlane.xlu0 %1987
      %v1989 = vadd.f32 %v1509, %v1895
      %v1990 = vadd.f32 %v1510, %v1898
      %v1991 = vadd.f32 %v1511, %v1901
      %v1992 = vadd.f32 %v1512, %v1904
      %v1993 = vadd.f32 %v1513, %v1907
      %v1994 = vadd.f32 %v1514, %v1910
      %v1995 = vadd.f32 %v1515, %v1913
      %v1996 = vadd.f32 %v1516, %v1916
      %v1997 = vadd.f32 %v1517, %v1919
      %v1998 = vadd.f32 %v1518, %v1922
      %v1999 = vadd.f32 %v1519, %v1925
      %v2000 = vadd.f32 %v1520, %v1928
      %v2001 = vadd.f32 %v1521, %v1931
      %v2002 = vadd.f32 %v1522, %v1934
      %v2003 = vadd.f32 %v1523, %v1937
      %v2004 = vadd.f32 %v1524, %v1940
      %v2005 = vadd.f32 %v1525, %v1943
      %v2006 = vadd.f32 %v1526, %v1946
      %v2007 = vadd.f32 %v1527, %v1949
      %v2008 = vadd.f32 %v1528, %v1952
      %v2009 = vadd.f32 %v1529, %v1955
      %v2010 = vadd.f32 %v1530, %v1958
      %v2011 = vadd.f32 %v1531, %v1961
      %v2012 = vadd.f32 %v1532, %v1964
      %v2013 = vadd.f32 %v1533, %v1967
      %v2014 = vadd.f32 %v1534, %v1970
      %v2015 = vadd.f32 %v1535, %v1973
      %v2016 = vadd.f32 %v1536, %v1976
      %v2017 = vadd.f32 %v1537, %v1979
      %v2018 = vadd.f32 %v1538, %v1982
      %v2019 = vadd.f32 %v1539, %v1985
      %v2020 = vadd.f32 %v1540, %v1988
      %2021 = vst.msk [vmem:[#allocation3] sm:$0xff] %vm1188, %v1989
      %2022 = vst.msk [vmem:[#allocation3 + $0x8] sm:$0xff] %vm1188, %v1990
      %2023 = vst.msk [vmem:[#allocation3 + $0x10] sm:$0xff] %vm1188, %v1991
      %2024 = vst.msk [vmem:[#allocation3 + $0x18] sm:$0xff] %vm1188, %v1992
      %2025 = vst.msk [vmem:[#allocation3 + $0x20] sm:$0xff] %vm1188, %v1993
      %2026 = vst.msk [vmem:[#allocation3 + $0x28] sm:$0xff] %vm1188, %v1994
      %2027 = vst.msk [vmem:[#allocation3 + $0x30] sm:$0xff] %vm1188, %v1995
      %2028 = vst.msk [vmem:[#allocation3 + $0x38] sm:$0xff] %vm1188, %v1996
      %2029 = vst.msk [vmem:[#allocation3 + $0x40] sm:$0xff] %vm1188, %v1997
      %2030 = vst.msk [vmem:[#allocation3 + $0x48] sm:$0xff] %vm1188, %v1998
      %2031 = vst.msk [vmem:[#allocation3 + $0x50] sm:$0xff] %vm1188, %v1999
      %2032 = vst.msk [vmem:[#allocation3 + $0x58] sm:$0xff] %vm1188, %v2000
      %2033 = vst.msk [vmem:[#allocation3 + $0x60] sm:$0xff] %vm1188, %v2001
      %2034 = vst.msk [vmem:[#allocation3 + $0x68] sm:$0xff] %vm1188, %v2002
      %2035 = vst.msk [vmem:[#allocation3 + $0x70] sm:$0xff] %vm1188, %v2003
      %2036 = vst.msk [vmem:[#allocation3 + $0x78] sm:$0xff] %vm1188, %v2004
      %2037 = vst.msk [vmem:[#allocation3 + $0x80] sm:$0xff] %vm1188, %v2005
      %2038 = vst.msk [vmem:[#allocation3 + $0x88] sm:$0xff] %vm1188, %v2006
      %2039 = vst.msk [vmem:[#allocation3 + $0x90] sm:$0xff] %vm1188, %v2007
      %2040 = vst.msk [vmem:[#allocation3 + $0x98] sm:$0xff] %vm1188, %v2008
      %2041 = vst.msk [vmem:[#allocation3 + $0xa0] sm:$0xff] %vm1188, %v2009
      %2042 = vst.msk [vmem:[#allocation3 + $0xa8] sm:$0xff] %vm1188, %v2010
      %2043 = vst.msk [vmem:[#allocation3 + $0xb0] sm:$0xff] %vm1188, %v2011
      %2044 = vst.msk [vmem:[#allocation3 + $0xb8] sm:$0xff] %vm1188, %v2012
      %2045 = vst.msk [vmem:[#allocation3 + $0xc0] sm:$0xff] %vm1188, %v2013
      %2046 = vst.msk [vmem:[#allocation3 + $0xc8] sm:$0xff] %vm1188, %v2014
      %2047 = vst.msk [vmem:[#allocation3 + $0xd0] sm:$0xff] %vm1188, %v2015
      %2048 = vst.msk [vmem:[#allocation3 + $0xd8] sm:$0xff] %vm1188, %v2016
      %2049 = vst.msk [vmem:[#allocation3 + $0xe0] sm:$0xff] %vm1188, %v2017
      %2050 = vst.msk [vmem:[#allocation3 + $0xe8] sm:$0xff] %vm1188, %v2018
      %2051 = vst.msk [vmem:[#allocation3 + $0xf0] sm:$0xff] %vm1188, %v2019
      %2052 = vst.msk [vmem:[#allocation3 + $0xf8] sm:$0xff] %vm1188, %v2020
      %2053 = vst.msk [vmem:[#allocation2] sm:$0xff] %vm1188, %v1349
      %2054 = vst.msk [vmem:[#allocation2 + $0x8] sm:$0xff] %vm1188, %v1350
      %2055 = vst.msk [vmem:[#allocation2 + $0x10] sm:$0xff] %vm1188, %v1351
      %2056 = vst.msk [vmem:[#allocation2 + $0x18] sm:$0xff] %vm1188, %v1352
      %2057 = vst.msk [vmem:[#allocation2 + $0x20] sm:$0xff] %vm1188, %v1353
      %2058 = vst.msk [vmem:[#allocation2 + $0x28] sm:$0xff] %vm1188, %v1354
      %2059 = vst.msk [vmem:[#allocation2 + $0x30] sm:$0xff] %vm1188, %v1355
      %2060 = vst.msk [vmem:[#allocation2 + $0x38] sm:$0xff] %vm1188, %v1356
      %2061 = vst.msk [vmem:[#allocation2 + $0x40] sm:$0xff] %vm1188, %v1357
      %2062 = vst.msk [vmem:[#allocation2 + $0x48] sm:$0xff] %vm1188, %v1358
      %2063 = vst.msk [vmem:[#allocation2 + $0x50] sm:$0xff] %vm1188, %v1359
      %2064 = vst.msk [vmem:[#allocation2 + $0x58] sm:$0xff] %vm1188, %v1360
      %2065 = vst.msk [vmem:[#allocation2 + $0x60] sm:$0xff] %vm1188, %v1361
      %2066 = vst.msk [vmem:[#allocation2 + $0x68] sm:$0xff] %vm1188, %v1362
      %2067 = vst.msk [vmem:[#allocation2 + $0x70] sm:$0xff] %vm1188, %v1363
      %2068 = vst.msk [vmem:[#allocation2 + $0x78] sm:$0xff] %vm1188, %v1364
      %2069 = vst.msk [vmem:[#allocation2 + $0x80] sm:$0xff] %vm1188, %v1365
      %2070 = vst.msk [vmem:[#allocation2 + $0x88] sm:$0xff] %vm1188, %v1366
      %2071 = vst.msk [vmem:[#allocation2 + $0x90] sm:$0xff] %vm1188, %v1367
      %2072 = vst.msk [vmem:[#allocation2 + $0x98] sm:$0xff] %vm1188, %v1368
      %2073 = vst.msk [vmem:[#allocation2 + $0xa0] sm:$0xff] %vm1188, %v1369
      %2074 = vst.msk [vmem:[#allocation2 + $0xa8] sm:$0xff] %vm1188, %v1370
      %2075 = vst.msk [vmem:[#allocation2 + $0xb0] sm:$0xff] %vm1188, %v1371
      %2076 = vst.msk [vmem:[#allocation2 + $0xb8] sm:$0xff] %vm1188, %v1372
      %2077 = vst.msk [vmem:[#allocation2 + $0xc0] sm:$0xff] %vm1188, %v1373
      %2078 = vst.msk [vmem:[#allocation2 + $0xc8] sm:$0xff] %vm1188, %v1374
      %2079 = vst.msk [vmem:[#allocation2 + $0xd0] sm:$0xff] %vm1188, %v1375
      %2080 = vst.msk [vmem:[#allocation2 + $0xd8] sm:$0xff] %vm1188, %v1376
      %2081 = vst.msk [vmem:[#allocation2 + $0xe0] sm:$0xff] %vm1188, %v1377
      %2082 = vst.msk [vmem:[#allocation2 + $0xe8] sm:$0xff] %vm1188, %v1378
      %2083 = vst.msk [vmem:[#allocation2 + $0xf0] sm:$0xff] %vm1188, %v1379
      %2084 = vst.msk [vmem:[#allocation2 + $0xf8] sm:$0xff] %vm1188, %v1380
      %p2085 = scmp.eq.s32.totalorder %s19, 3
      // Predicated region
      $region37: #{minis_lm_head_loss.1} parent=31 // pred_check
        %p2086 = pneg %p2085
      $region38: #{minis_lm_head_loss.1} parent=31 // pred_check_branch
        %2088 = sbr.rel (%p2086) target = $region40
      $region39: #{minis_lm_head_loss.1} parent=31 // pred_region
        %v2089 = vld [vmem:[#allocation2] sm:$0xff]
        %v2090 = vld [vmem:[#allocation2 + $0x8] sm:$0xff]
        %v2091 = vld [vmem:[#allocation2 + $0x10] sm:$0xff]
        %v2092 = vld [vmem:[#allocation2 + $0x18] sm:$0xff]
        %v2093 = vld [vmem:[#allocation2 + $0x20] sm:$0xff]
        %v2094 = vld [vmem:[#allocation2 + $0x28] sm:$0xff]
        %v2095 = vld [vmem:[#allocation2 + $0x30] sm:$0xff]
        %v2096 = vld [vmem:[#allocation2 + $0x38] sm:$0xff]
        %v2097 = vld [vmem:[#allocation2 + $0x40] sm:$0xff]
        %v2098 = vld [vmem:[#allocation2 + $0x48] sm:$0xff]
        %v2099 = vld [vmem:[#allocation2 + $0x50] sm:$0xff]
        %v2100 = vld [vmem:[#allocation2 + $0x58] sm:$0xff]
        %v2101 = vld [vmem:[#allocation2 + $0x60] sm:$0xff]
        %v2102 = vld [vmem:[#allocation2 + $0x68] sm:$0xff]
        %v2103 = vld [vmem:[#allocation2 + $0x70] sm:$0xff]
        %v2104 = vld [vmem:[#allocation2 + $0x78] sm:$0xff]
        %v2105 = vld [vmem:[#allocation2 + $0x80] sm:$0xff]
        %v2106 = vld [vmem:[#allocation2 + $0x88] sm:$0xff]
        %v2107 = vld [vmem:[#allocation2 + $0x90] sm:$0xff]
        %v2108 = vld [vmem:[#allocation2 + $0x98] sm:$0xff]
        %v2109 = vld [vmem:[#allocation2 + $0xa0] sm:$0xff]
        %v2110 = vld [vmem:[#allocation2 + $0xa8] sm:$0xff]
        %v2111 = vld [vmem:[#allocation2 + $0xb0] sm:$0xff]
        %v2112 = vld [vmem:[#allocation2 + $0xb8] sm:$0xff]
        %v2113 = vld [vmem:[#allocation2 + $0xc0] sm:$0xff]
        %v2114 = vld [vmem:[#allocation2 + $0xc8] sm:$0xff]
        %v2115 = vld [vmem:[#allocation2 + $0xd0] sm:$0xff]
        %v2116 = vld [vmem:[#allocation2 + $0xd8] sm:$0xff]
        %v2117 = vld [vmem:[#allocation2 + $0xe0] sm:$0xff]
        %v2118 = vld [vmem:[#allocation2 + $0xe8] sm:$0xff]
        %v2119 = vld [vmem:[#allocation2 + $0xf0] sm:$0xff]
        %v2120 = vld [vmem:[#allocation2 + $0xf8] sm:$0xff]
        %v2121 = vld [vmem:[#allocation3] sm:$0xff]
        %v2122 = vld [vmem:[#allocation3 + $0x8] sm:$0xff]
        %v2123 = vld [vmem:[#allocation3 + $0x10] sm:$0xff]
        %v2124 = vld [vmem:[#allocation3 + $0x18] sm:$0xff]
        %v2125 = vld [vmem:[#allocation3 + $0x20] sm:$0xff]
        %v2126 = vld [vmem:[#allocation3 + $0x28] sm:$0xff]
        %v2127 = vld [vmem:[#allocation3 + $0x30] sm:$0xff]
        %v2128 = vld [vmem:[#allocation3 + $0x38] sm:$0xff]
        %v2129 = vld [vmem:[#allocation3 + $0x40] sm:$0xff]
        %v2130 = vld [vmem:[#allocation3 + $0x48] sm:$0xff]
        %v2131 = vld [vmem:[#allocation3 + $0x50] sm:$0xff]
        %v2132 = vld [vmem:[#allocation3 + $0x58] sm:$0xff]
        %v2133 = vld [vmem:[#allocation3 + $0x60] sm:$0xff]
        %v2134 = vld [vmem:[#allocation3 + $0x68] sm:$0xff]
        %v2135 = vld [vmem:[#allocation3 + $0x70] sm:$0xff]
        %v2136 = vld [vmem:[#allocation3 + $0x78] sm:$0xff]
        %v2137 = vld [vmem:[#allocation3 + $0x80] sm:$0xff]
        %v2138 = vld [vmem:[#allocation3 + $0x88] sm:$0xff]
        %v2139 = vld [vmem:[#allocation3 + $0x90] sm:$0xff]
        %v2140 = vld [vmem:[#allocation3 + $0x98] sm:$0xff]
        %v2141 = vld [vmem:[#allocation3 + $0xa0] sm:$0xff]
        %v2142 = vld [vmem:[#allocation3 + $0xa8] sm:$0xff]
        %v2143 = vld [vmem:[#allocation3 + $0xb0] sm:$0xff]
        %v2144 = vld [vmem:[#allocation3 + $0xb8] sm:$0xff]
        %v2145 = vld [vmem:[#allocation3 + $0xc0] sm:$0xff]
        %v2146 = vld [vmem:[#allocation3 + $0xc8] sm:$0xff]
        %v2147 = vld [vmem:[#allocation3 + $0xd0] sm:$0xff]
        %v2148 = vld [vmem:[#allocation3 + $0xd8] sm:$0xff]
        %v2149 = vld [vmem:[#allocation3 + $0xe0] sm:$0xff]
        %v2150 = vld [vmem:[#allocation3 + $0xe8] sm:$0xff]
        %v2151 = vld [vmem:[#allocation3 + $0xf0] sm:$0xff]
        %v2152 = vld [vmem:[#allocation3 + $0xf8] sm:$0xff]
        %v2153 = vlog2.pop %v2121
        %v2154 = vmul.f32 %v2153, 0.6931472
        %v2155 = vlog2.pop %v2122
        %v2156 = vmul.f32 %v2155, 0.6931472
        %v2157 = vlog2.pop %v2123
        %v2158 = vmul.f32 %v2157, 0.6931472
        %v2159 = vlog2.pop %v2124
        %v2160 = vmul.f32 %v2159, 0.6931472
        %v2161 = vlog2.pop %v2125
        %v2162 = vmul.f32 %v2161, 0.6931472
        %v2163 = vlog2.pop %v2126
        %v2164 = vmul.f32 %v2163, 0.6931472
        %v2165 = vlog2.pop %v2127
        %v2166 = vmul.f32 %v2165, 0.6931472
        %v2167 = vlog2.pop %v2128
        %v2168 = vmul.f32 %v2167, 0.6931472
        %v2169 = vlog2.pop %v2129
        %v2170 = vmul.f32 %v2169, 0.6931472
        %v2171 = vlog2.pop %v2130
        %v2172 = vmul.f32 %v2171, 0.6931472
        %v2173 = vlog2.pop %v2131
        %v2174 = vmul.f32 %v2173, 0.6931472
        %v2175 = vlog2.pop %v2132
        %v2176 = vmul.f32 %v2175, 0.6931472
        %v2177 = vlog2.pop %v2133
        %v2178 = vmul.f32 %v2177, 0.6931472
        %v2179 = vlog2.pop %v2134
        %v2180 = vmul.f32 %v2179, 0.6931472
        %v2181 = vlog2.pop %v2135
        %v2182 = vmul.f32 %v2181, 0.6931472
        %v2183 = vlog2.pop %v2136
        %v2184 = vmul.f32 %v2183, 0.6931472
        %v2185 = vlog2.pop %v2137
        %v2186 = vmul.f32 %v2185, 0.6931472
        %v2187 = vlog2.pop %v2138
        %v2188 = vmul.f32 %v2187, 0.6931472
        %v2189 = vlog2.pop %v2139
        %v2190 = vmul.f32 %v2189, 0.6931472
        %v2191 = vlog2.pop %v2140
        %v2192 = vmul.f32 %v2191, 0.6931472
        %v2193 = vlog2.pop %v2141
        %v2194 = vmul.f32 %v2193, 0.6931472
        %v2195 = vlog2.pop %v2142
        %v2196 = vmul.f32 %v2195, 0.6931472
        %v2197 = vlog2.pop %v2143
        %v2198 = vmul.f32 %v2197, 0.6931472
        %v2199 = vlog2.pop %v2144
        %v2200 = vmul.f32 %v2199, 0.6931472
        %v2201 = vlog2.pop %v2145
        %v2202 = vmul.f32 %v2201, 0.6931472
        %v2203 = vlog2.pop %v2146
        %v2204 = vmul.f32 %v2203, 0.6931472
        %v2205 = vlog2.pop %v2147
        %v2206 = vmul.f32 %v2205, 0.6931472
        %v2207 = vlog2.pop %v2148
        %v2208 = vmul.f32 %v2207, 0.6931472
        %v2209 = vlog2.pop %v2149
        %v2210 = vmul.f32 %v2209, 0.6931472
        %v2211 = vlog2.pop %v2150
        %v2212 = vmul.f32 %v2211, 0.6931472
        %v2213 = vlog2.pop %v2151
        %v2214 = vmul.f32 %v2213, 0.6931472
        %v2215 = vlog2.pop %v2152
        %v2216 = vmul.f32 %v2215, 0.6931472
        %v2217 = vadd.f32 %v2089, %v2154
        %v2218 = vadd.f32 %v2090, %v2156
        %v2219 = vadd.f32 %v2091, %v2158
        %v2220 = vadd.f32 %v2092, %v2160
        %v2221 = vadd.f32 %v2093, %v2162
        %v2222 = vadd.f32 %v2094, %v2164
        %v2223 = vadd.f32 %v2095, %v2166
        %v2224 = vadd.f32 %v2096, %v2168
        %v2225 = vadd.f32 %v2097, %v2170
        %v2226 = vadd.f32 %v2098, %v2172
        %v2227 = vadd.f32 %v2099, %v2174
        %v2228 = vadd.f32 %v2100, %v2176
        %v2229 = vadd.f32 %v2101, %v2178
        %v2230 = vadd.f32 %v2102, %v2180
        %v2231 = vadd.f32 %v2103, %v2182
        %v2232 = vadd.f32 %v2104, %v2184
        %v2233 = vadd.f32 %v2105, %v2186
        %v2234 = vadd.f32 %v2106, %v2188
        %v2235 = vadd.f32 %v2107, %v2190
        %v2236 = vadd.f32 %v2108, %v2192
        %v2237 = vadd.f32 %v2109, %v2194
        %v2238 = vadd.f32 %v2110, %v2196
        %v2239 = vadd.f32 %v2111, %v2198
        %v2240 = vadd.f32 %v2112, %v2200
        %v2241 = vadd.f32 %v2113, %v2202
        %v2242 = vadd.f32 %v2114, %v2204
        %v2243 = vadd.f32 %v2115, %v2206
        %v2244 = vadd.f32 %v2116, %v2208
        %v2245 = vadd.f32 %v2117, %v2210
        %v2246 = vadd.f32 %v2118, %v2212
        %v2247 = vadd.f32 %v2119, %v2214
        %v2248 = vadd.f32 %v2120, %v2216
        %v2249 = vld [vmem:[%s222] sm:$0xff]
        %v2250 = vld [vmem:[%s222 + $0x8] sm:$0xff]
        %v2251 = vld [vmem:[%s222 + $0x10] sm:$0xff]
        %v2252 = vld [vmem:[%s222 + $0x18] sm:$0xff]
        %v2253 = vld [vmem:[%s222 + $0x20] sm:$0xff]
        %v2254 = vld [vmem:[%s222 + $0x28] sm:$0xff]
        %v2255 = vld [vmem:[%s222 + $0x30] sm:$0xff]
        %v2256 = vld [vmem:[%s222 + $0x38] sm:$0xff]
        %v2257 = vld [vmem:[%s222 + $0x40] sm:$0xff]
        %v2258 = vld [vmem:[%s222 + $0x48] sm:$0xff]
        %v2259 = vld [vmem:[%s222 + $0x50] sm:$0xff]
        %v2260 = vld [vmem:[%s222 + $0x58] sm:$0xff]
        %v2261 = vld [vmem:[%s222 + $0x60] sm:$0xff]
        %v2262 = vld [vmem:[%s222 + $0x68] sm:$0xff]
        %v2263 = vld [vmem:[%s222 + $0x70] sm:$0xff]
        %v2264 = vld [vmem:[%s222 + $0x78] sm:$0xff]
        %v2265 = vld [vmem:[%s222 + $0x80] sm:$0xff]
        %v2266 = vld [vmem:[%s222 + $0x88] sm:$0xff]
        %v2267 = vld [vmem:[%s222 + $0x90] sm:$0xff]
        %v2268 = vld [vmem:[%s222 + $0x98] sm:$0xff]
        %v2269 = vld [vmem:[%s222 + $0xa0] sm:$0xff]
        %v2270 = vld [vmem:[%s222 + $0xa8] sm:$0xff]
        %v2271 = vld [vmem:[%s222 + $0xb0] sm:$0xff]
        %v2272 = vld [vmem:[%s222 + $0xb8] sm:$0xff]
        %v2273 = vld [vmem:[%s222 + $0xc0] sm:$0xff]
        %v2274 = vld [vmem:[%s222 + $0xc8] sm:$0xff]
        %v2275 = vld [vmem:[%s222 + $0xd0] sm:$0xff]
        %v2276 = vld [vmem:[%s222 + $0xd8] sm:$0xff]
        %v2277 = vld [vmem:[%s222 + $0xe0] sm:$0xff]
        %v2278 = vld [vmem:[%s222 + $0xe8] sm:$0xff]
        %v2279 = vld [vmem:[%s222 + $0xf0] sm:$0xff]
        %v2280 = vld [vmem:[%s222 + $0xf8] sm:$0xff]
        %vm2281 = vcmp.ne.s32.totalorder %v2249, 4294967196
        %vm2282 = vcmp.ne.s32.totalorder %v2250, 4294967196
        %vm2283 = vcmp.ne.s32.totalorder %v2251, 4294967196
        %vm2284 = vcmp.ne.s32.totalorder %v2252, 4294967196
        %vm2285 = vcmp.ne.s32.totalorder %v2253, 4294967196
        %vm2286 = vcmp.ne.s32.totalorder %v2254, 4294967196
        %vm2287 = vcmp.ne.s32.totalorder %v2255, 4294967196
        %vm2288 = vcmp.ne.s32.totalorder %v2256, 4294967196
        %vm2289 = vcmp.ne.s32.totalorder %v2257, 4294967196
        %vm2290 = vcmp.ne.s32.totalorder %v2258, 4294967196
        %vm2291 = vcmp.ne.s32.totalorder %v2259, 4294967196
        %vm2292 = vcmp.ne.s32.totalorder %v2260, 4294967196
        %vm2293 = vcmp.ne.s32.totalorder %v2261, 4294967196
        %vm2294 = vcmp.ne.s32.totalorder %v2262, 4294967196
        %vm2295 = vcmp.ne.s32.totalorder %v2263, 4294967196
        %vm2296 = vcmp.ne.s32.totalorder %v2264, 4294967196
        %vm2297 = vcmp.ne.s32.totalorder %v2265, 4294967196
        %vm2298 = vcmp.ne.s32.totalorder %v2266, 4294967196
        %vm2299 = vcmp.ne.s32.totalorder %v2267, 4294967196
        %vm2300 = vcmp.ne.s32.totalorder %v2268, 4294967196
        %vm2301 = vcmp.ne.s32.totalorder %v2269, 4294967196
        %vm2302 = vcmp.ne.s32.totalorder %v2270, 4294967196
        %vm2303 = vcmp.ne.s32.totalorder %v2271, 4294967196
        %vm2304 = vcmp.ne.s32.totalorder %v2272, 4294967196
        %vm2305 = vcmp.ne.s32.totalorder %v2273, 4294967196
        %vm2306 = vcmp.ne.s32.totalorder %v2274, 4294967196
        %vm2307 = vcmp.ne.s32.totalorder %v2275, 4294967196
        %vm2308 = vcmp.ne.s32.totalorder %v2276, 4294967196
        %vm2309 = vcmp.ne.s32.totalorder %v2277, 4294967196
        %vm2310 = vcmp.ne.s32.totalorder %v2278, 4294967196
        %vm2311 = vcmp.ne.s32.totalorder %v2279, 4294967196
        %vm2312 = vcmp.ne.s32.totalorder %v2280, 4294967196
        %v2313 = vld [vmem:[#allocation4] sm:$0xff]
        %v2314 = vld [vmem:[#allocation4 + $0x8] sm:$0xff]
        %v2315 = vld [vmem:[#allocation4 + $0x10] sm:$0xff]
        %v2316 = vld [vmem:[#allocation4 + $0x18] sm:$0xff]
        %v2317 = vld [vmem:[#allocation4 + $0x20] sm:$0xff]
        %v2318 = vld [vmem:[#allocation4 + $0x28] sm:$0xff]
        %v2319 = vld [vmem:[#allocation4 + $0x30] sm:$0xff]
        %v2320 = vld [vmem:[#allocation4 + $0x38] sm:$0xff]
        %v2321 = vld [vmem:[#allocation4 + $0x40] sm:$0xff]
        %v2322 = vld [vmem:[#allocation4 + $0x48] sm:$0xff]
        %v2323 = vld [vmem:[#allocation4 + $0x50] sm:$0xff]
        %v2324 = vld [vmem:[#allocation4 + $0x58] sm:$0xff]
        %v2325 = vld [vmem:[#allocation4 + $0x60] sm:$0xff]
        %v2326 = vld [vmem:[#allocation4 + $0x68] sm:$0xff]
        %v2327 = vld [vmem:[#allocation4 + $0x70] sm:$0xff]
        %v2328 = vld [vmem:[#allocation4 + $0x78] sm:$0xff]
        %v2329 = vld [vmem:[#allocation4 + $0x80] sm:$0xff]
        %v2330 = vld [vmem:[#allocation4 + $0x88] sm:$0xff]
        %v2331 = vld [vmem:[#allocation4 + $0x90] sm:$0xff]
        %v2332 = vld [vmem:[#allocation4 + $0x98] sm:$0xff]
        %v2333 = vld [vmem:[#allocation4 + $0xa0] sm:$0xff]
        %v2334 = vld [vmem:[#allocation4 + $0xa8] sm:$0xff]
        %v2335 = vld [vmem:[#allocation4 + $0xb0] sm:$0xff]
        %v2336 = vld [vmem:[#allocation4 + $0xb8] sm:$0xff]
        %v2337 = vld [vmem:[#allocation4 + $0xc0] sm:$0xff]
        %v2338 = vld [vmem:[#allocation4 + $0xc8] sm:$0xff]
        %v2339 = vld [vmem:[#allocation4 + $0xd0] sm:$0xff]
        %v2340 = vld [vmem:[#allocation4 + $0xd8] sm:$0xff]
        %v2341 = vld [vmem:[#allocation4 + $0xe0] sm:$0xff]
        %v2342 = vld [vmem:[#allocation4 + $0xe8] sm:$0xff]
        %v2343 = vld [vmem:[#allocation4 + $0xf0] sm:$0xff]
        %v2344 = vld [vmem:[#allocation4 + $0xf8] sm:$0xff]
        %v2345 = vsub.f32 %v2217, %v2313
        %v2346 = vsub.f32 %v2218, %v2314
        %v2347 = vsub.f32 %v2219, %v2315
        %v2348 = vsub.f32 %v2220, %v2316
        %v2349 = vsub.f32 %v2221, %v2317
        %v2350 = vsub.f32 %v2222, %v2318
        %v2351 = vsub.f32 %v2223, %v2319
        %v2352 = vsub.f32 %v2224, %v2320
        %v2353 = vsub.f32 %v2225, %v2321
        %v2354 = vsub.f32 %v2226, %v2322
        %v2355 = vsub.f32 %v2227, %v2323
        %v2356 = vsub.f32 %v2228, %v2324
        %v2357 = vsub.f32 %v2229, %v2325
        %v2358 = vsub.f32 %v2230, %v2326
        %v2359 = vsub.f32 %v2231, %v2327
        %v2360 = vsub.f32 %v2232, %v2328
        %v2361 = vsub.f32 %v2233, %v2329
        %v2362 = vsub.f32 %v2234, %v2330
        %v2363 = vsub.f32 %v2235, %v2331
        %v2364 = vsub.f32 %v2236, %v2332
        %v2365 = vsub.f32 %v2237, %v2333
        %v2366 = vsub.f32 %v2238, %v2334
        %v2367 = vsub.f32 %v2239, %v2335
        %v2368 = vsub.f32 %v2240, %v2336
        %v2369 = vsub.f32 %v2241, %v2337
        %v2370 = vsub.f32 %v2242, %v2338
        %v2371 = vsub.f32 %v2243, %v2339
        %v2372 = vsub.f32 %v2244, %v2340
        %v2373 = vsub.f32 %v2245, %v2341
        %v2374 = vsub.f32 %v2246, %v2342
        %v2375 = vsub.f32 %v2247, %v2343
        %v2376 = vsub.f32 %v2248, %v2344
        %v2377 = vsel %vm2281, %v2345, 0.0
        %v2378 = vsel %vm2282, %v2346, 0.0
        %v2379 = vsel %vm2283, %v2347, 0.0
        %v2380 = vsel %vm2284, %v2348, 0.0
        %v2381 = vsel %vm2285, %v2349, 0.0
        %v2382 = vsel %vm2286, %v2350, 0.0
        %v2383 = vsel %vm2287, %v2351, 0.0
        %v2384 = vsel %vm2288, %v2352, 0.0
        %v2385 = vsel %vm2289, %v2353, 0.0
        %v2386 = vsel %vm2290, %v2354, 0.0
        %v2387 = vsel %vm2291, %v2355, 0.0
        %v2388 = vsel %vm2292, %v2356, 0.0
        %v2389 = vsel %vm2293, %v2357, 0.0
        %v2390 = vsel %vm2294, %v2358, 0.0
        %v2391 = vsel %vm2295, %v2359, 0.0
        %v2392 = vsel %vm2296, %v2360, 0.0
        %v2393 = vsel %vm2297, %v2361, 0.0
        %v2394 = vsel %vm2298, %v2362, 0.0
        %v2395 = vsel %vm2299, %v2363, 0.0
        %v2396 = vsel %vm2300, %v2364, 0.0
        %v2397 = vsel %vm2301, %v2365, 0.0
        %v2398 = vsel %vm2302, %v2366, 0.0
        %v2399 = vsel %vm2303, %v2367, 0.0
        %v2400 = vsel %vm2304, %v2368, 0.0
        %v2401 = vsel %vm2305, %v2369, 0.0
        %v2402 = vsel %vm2306, %v2370, 0.0
        %v2403 = vsel %vm2307, %v2371, 0.0
        %v2404 = vsel %vm2308, %v2372, 0.0
        %v2405 = vsel %vm2309, %v2373, 0.0
        %v2406 = vsel %vm2310, %v2374, 0.0
        %v2407 = vsel %vm2311, %v2375, 0.0
        %v2408 = vsel %vm2312, %v2376, 0.0
        %2409 = vst.msk [vmem:[%s228] sm:$0xff] %vm1188, %v2377
        %2410 = vst.msk [vmem:[%s228 + $0x8] sm:$0xff] %vm1188, %v2378
        %2411 = vst.msk [vmem:[%s228 + $0x10] sm:$0xff] %vm1188, %v2379
        %2412 = vst.msk [vmem:[%s228 + $0x18] sm:$0xff] %vm1188, %v2380
        %2413 = vst.msk [vmem:[%s228 + $0x20] sm:$0xff] %vm1188, %v2381
        %2414 = vst.msk [vmem:[%s228 + $0x28] sm:$0xff] %vm1188, %v2382
        %2415 = vst.msk [vmem:[%s228 + $0x30] sm:$0xff] %vm1188, %v2383
        %2416 = vst.msk [vmem:[%s228 + $0x38] sm:$0xff] %vm1188, %v2384
        %2417 = vst.msk [vmem:[%s228 + $0x40] sm:$0xff] %vm1188, %v2385
        %2418 = vst.msk [vmem:[%s228 + $0x48] sm:$0xff] %vm1188, %v2386
        %2419 = vst.msk [vmem:[%s228 + $0x50] sm:$0xff] %vm1188, %v2387
        %2420 = vst.msk [vmem:[%s228 + $0x58] sm:$0xff] %vm1188, %v2388
        %2421 = vst.msk [vmem:[%s228 + $0x60] sm:$0xff] %vm1188, %v2389
        %2422 = vst.msk [vmem:[%s228 + $0x68] sm:$0xff] %vm1188, %v2390
        %2423 = vst.msk [vmem:[%s228 + $0x70] sm:$0xff] %vm1188, %v2391
        %2424 = vst.msk [vmem:[%s228 + $0x78] sm:$0xff] %vm1188, %v2392
        %2425 = vst.msk [vmem:[%s228 + $0x80] sm:$0xff] %vm1188, %v2393
        %2426 = vst.msk [vmem:[%s228 + $0x88] sm:$0xff] %vm1188, %v2394
        %2427 = vst.msk [vmem:[%s228 + $0x90] sm:$0xff] %vm1188, %v2395
        %2428 = vst.msk [vmem:[%s228 + $0x98] sm:$0xff] %vm1188, %v2396
        %2429 = vst.msk [vmem:[%s228 + $0xa0] sm:$0xff] %vm1188, %v2397
        %2430 = vst.msk [vmem:[%s228 + $0xa8] sm:$0xff] %vm1188, %v2398
        %2431 = vst.msk [vmem:[%s228 + $0xb0] sm:$0xff] %vm1188, %v2399
        %2432 = vst.msk [vmem:[%s228 + $0xb8] sm:$0xff] %vm1188, %v2400
        %2433 = vst.msk [vmem:[%s228 + $0xc0] sm:$0xff] %vm1188, %v2401
        %2434 = vst.msk [vmem:[%s228 + $0xc8] sm:$0xff] %vm1188, %v2402
        %2435 = vst.msk [vmem:[%s228 + $0xd0] sm:$0xff] %vm1188, %v2403
        %2436 = vst.msk [vmem:[%s228 + $0xd8] sm:$0xff] %vm1188, %v2404
        %2437 = vst.msk [vmem:[%s228 + $0xe0] sm:$0xff] %vm1188, %v2405
        %2438 = vst.msk [vmem:[%s228 + $0xe8] sm:$0xff] %vm1188, %v2406
        %2439 = vst.msk [vmem:[%s228 + $0xf0] sm:$0xff] %vm1188, %v2407
        %2440 = vst.msk [vmem:[%s228 + $0xf8] sm:$0xff] %vm1188, %v2408
      $region40: #{minis_lm_head_loss.1} parent=31 // pred_fallthru
        _
      %s2441 = smul.u32 32, %s18
      %p2442 = scmp.lt.s32.totalorder %s2441, 63
      %s2443 = scalar_select %p2442, %s2441, 63
      %s2444 = smul.addr %s2443, 8
      %s2445 = scalar_lea.vmem %s3, %s2444
      // Predicated region
      $region41: #{minis_lm_head_loss.1} parent=31 // pred_check
        %p2446 = pneg %p122
      $region42: #{minis_lm_head_loss.1} parent=31 // pred_check_branch
        %2448 = sbr.rel (%p2446) target = $region44
      $region43: #{minis_lm_head_loss.1} parent=31 // pred_region
        %s2449 = smul.u32 32, %s18
      $region44: #{minis_lm_head_loss.1} parent=31 // pred_fallthru
        _
    $region32: #{minis_lm_head_loss.1} parent=5 // pred_fallthru
      _
    %p2450 = scmp.le.s32.totalorder 2, %s9
    // Predicated region
    $region45: #{minis_lm_head_loss.1} parent=5 // pred_check
      %p2451 = pneg %p2450
    $region46: #{minis_lm_head_loss.1} parent=5 // pred_check_branch
      %2453 = sbr.rel (%p2451) target = $region48
    $region47: #{minis_lm_head_loss.1} parent=5 // pred_region
      %s2454 = ssub.s32 %s9, 2
      // Predicated region
      $region49: #{minis_lm_head_loss.1} parent=47 // pred_check
        %p2455 = pneg %p128
      $region50: #{minis_lm_head_loss.1} parent=47 // pred_check_branch
        %2457 = sbr.rel (%p2455) target = $region52
      $region51: #{minis_lm_head_loss.1} parent=47 // pred_region
        %s2458 = smul.u32 32, %s20
        %p2459 = scmp.lt.s32.totalorder %s2458, 63
        %s2460 = scalar_select %p2459, %s2458, 63
        %s2461 = smul.addr %s2460, 8
        %s2462 = scalar_lea.vmem %s3, %s2461
      $region52: #{minis_lm_head_loss.1} parent=47 // pred_fallthru
        _
    $region48: #{minis_lm_head_loss.1} parent=5 // pred_fallthru
      _
  $region6: #{minis_lm_head_loss.1} parent=0 // loop_footer
    %s13 = sadd.s32 1, %s9
  $region7: #{minis_lm_head_loss.1} parent=0 // loop_footer_branch
    %8 = sbr.rel target = $region3
  $region8: #{minis_lm_head_loss.1} parent=0 // loop_exit
    _

</llo_original>
